<compile_context>
chip_gen: v6e
topology: v6e:2x2x1
jax: 0.10.0
libtpu: 0.0.40
codegen_flags: <defaults>
</compile_context>

<pallas_src>
import jax
import jax.numpy as jnp
from jax.experimental import pallas as pl
from jax.experimental.pallas import tpu as pltpu


LANE = 128     # feature dims padded to full vreg lanes / MXU tiles
SUBLANE = 8    # batch tiles padded to the f32 sublane multiple


def _ceil_to(x, m):
    return ((x + m - 1) // m) * m


def _pad2(x, rows, cols, dtype):
    r, c = x.shape
    out = jnp.zeros((rows, cols), dtype)
    return out.at[:r, :c].set(x.astype(dtype))


def ic_da_kernel(
    s_ref, ns_ref, a_ref,
    we1_ref, be1_ref, we2_ref, be2_ref,
    wi1s_ref, wi1n_ref, bi1_ref, wi2_ref, bi2_ref, wi3_ref, bi3_ref,
    wf1s_ref, wf1a_ref, bf1_ref, wf2_ref, bf2_ref, wf3_ref, bf3_ref,
    inv_ref, phins_ref, phins_est_ref,
):
    f32 = jnp.float32
    bf16 = jnp.bfloat16

    def mm(x, w_ref):
        # bf16 x bf16 on the MXU, f32 accumulation.
        return jnp.dot(x, w_ref[...], preferred_element_type=f32)

    def encoder(x):
        h = jnp.maximum(mm(x, we1_ref) + be1_ref[...], 0.0)
        return mm(h.astype(bf16), we2_ref) + be2_ref[...]

    phi_s = encoder(s_ref[...])
    phi_ns = encoder(ns_ref[...])
    phins_ref[...] = phi_ns.astype(phins_ref.dtype)

    phi_s16 = phi_s.astype(bf16)
    phi_ns16 = phi_ns.astype(bf16)

    # inverse head on concat(phi_s, phi_ns): split-weight matmuls avoid the concat.
    h = jnp.maximum(
        mm(phi_s16, wi1s_ref) + mm(phi_ns16, wi1n_ref) + bi1_ref[...], 0.0)
    h = jnp.maximum(mm(h.astype(bf16), wi2_ref) + bi2_ref[...], 0.0)
    logits = mm(h.astype(bf16), wi3_ref) + bi3_ref[...]
    inv_ref[...] = (1.0 / (1.0 + jnp.exp(-logits))).astype(inv_ref.dtype)

    # forward head on concat(phi_s, action): split-weight matmuls.
    h = jnp.maximum(
        mm(phi_s16, wf1s_ref) + mm(a_ref[...], wf1a_ref) + bf1_ref[...], 0.0)
    h = jnp.maximum(mm(h.astype(bf16), wf2_ref) + bf2_ref[...], 0.0)
    phins_est_ref[...] = (mm(h.astype(bf16), wf3_ref) + bf3_ref[...]).astype(
        phins_est_ref.dtype)


def ic_da_forward(state_vec, action_vec, next_state_vec, params, *, block_b=None):
    """Batched IC_DA forward. Inputs are [B, a_dim] f32 dialogue-act vectors."""
    B, a_dim = state_vec.shape
    s_enc = params["we2"].shape[1]
    inv_h = params["wi2"].shape[1]
    fwd_h = params["wf2"].shape[1]

    A = _ceil_to(a_dim, LANE)      # padded a_dim
    E = _ceil_to(s_enc, LANE)      # padded s_enc_out_dim
    H_inv = _ceil_to(inv_h, LANE)  # padded inv_h_dim
    H_fwd = _ceil_to(fwd_h, LANE)  # padded fwd_h_dim

    if block_b is None:
        # aim for >=2 grid steps (megacore + pipelining), cap tiles at 512 rows.
        block_b = min(512, max(SUBLANE, _ceil_to(B, SUBLANE) // 2))
    block_b = max(SUBLANE, (block_b // SUBLANE) * SUBLANE)
    B_pad = _ceil_to(B, block_b)
    grid = (B_pad // block_b,)

    bf16, f32 = jnp.bfloat16, jnp.float32

    # inputs: zero-padded, bf16
    s_p = _pad2(state_vec, B_pad, A, bf16)
    ns_p = _pad2(next_state_vec, B_pad, A, bf16)
    a_p = _pad2(action_vec, B_pad, A, bf16)

    # weights: bf16, zero-padded [in, out]; biases: f32 [1, out]
    we1 = _pad2(params["we1"], A, E, bf16); be1 = _pad2(params["be1"], 1, E, f32)
    we2 = _pad2(params["we2"], E, E, bf16); be2 = _pad2(params["be2"], 1, E, f32)
    wi1s = _pad2(params["wi1"][:s_enc], E, H_inv, bf16)
    wi1n = _pad2(params["wi1"][s_enc:], E, H_inv, bf16)
    bi1 = _pad2(params["bi1"], 1, H_inv, f32)
    wi2 = _pad2(params["wi2"], H_inv, H_inv, bf16); bi2 = _pad2(params["bi2"], 1, H_inv, f32)
    wi3 = _pad2(params["wi3"], H_inv, A, bf16);     bi3 = _pad2(params["bi3"], 1, A, f32)
    wf1s = _pad2(params["wf1"][:s_enc], E, H_fwd, bf16)
    wf1a = _pad2(params["wf1"][s_enc:], A, H_fwd, bf16)
    bf1 = _pad2(params["bf1"], 1, H_fwd, f32)
    wf2 = _pad2(params["wf2"], H_fwd, H_fwd, bf16); bf2 = _pad2(params["bf2"], 1, H_fwd, f32)
    wf3 = _pad2(params["wf3"], H_fwd, E, bf16);     bf3 = _pad2(params["bf3"], 1, E, f32)

    weights = [we1, be1, we2, be2,
               wi1s, wi1n, bi1, wi2, bi2, wi3, bi3,
               wf1s, wf1a, bf1, wf2, bf2, wf3, bf3]

    batch_spec = lambda d: pl.BlockSpec((block_b, d), lambda i: (i, 0))
    # constant index_map -> block fetched once and kept resident across the grid
    full = lambda arr: pl.BlockSpec(arr.shape, lambda i: (0, 0))

    weight_bytes = sum(int(w.size) * w.dtype.itemsize for w in weights)
    flops_per_row = 2 * (2 * (A * E + E * E)                       # two encoder passes
                         + (2 * E * H_inv + H_inv * H_inv + H_inv * A)   # inv head
                         + (E * H_fwd + A * H_fwd + H_fwd * H_fwd + H_fwd * E))  # fwd head
    cost = pl.CostEstimate(
        flops=int(B_pad * flops_per_row),
        transcendentals=int(B_pad * A),                            # sigmoid exp
        bytes_accessed=int(3 * B_pad * A * 2 + weight_bytes + B_pad * (A + 2 * E) * 4),
    )

    out_shapes = (
        jax.ShapeDtypeStruct((B_pad, A), f32),   # sigmoid(inv_head(...))
        jax.ShapeDtypeStruct((B_pad, E), f32),   # phi_next_state
        jax.ShapeDtypeStruct((B_pad, E), f32),   # phi_next_state_est
    )

    out = pl.pallas_call(
        ic_da_kernel,
        out_shape=out_shapes,
        grid_spec=pltpu.PrefetchScalarGridSpec(
            num_scalar_prefetch=0,
            grid=grid,
            in_specs=[batch_spec(A), batch_spec(A), batch_spec(A)]
                     + [full(w) for w in weights],
            out_specs=(batch_spec(A), batch_spec(E), batch_spec(E)),
        ),
        compiler_params=pltpu.CompilerParams(
            dimension_semantics=("parallel",),
        ),
        cost_estimate=cost,
    )(s_p, ns_p, a_p, *weights)

    action_vec_est = out[0][:B, :a_dim]
    phi_next_state = out[1][:B, :s_enc]
    phi_next_state_est = out[2][:B, :s_enc]
    return action_vec_est, phi_next_state, phi_next_state_est


def init_ic_da_params(key, a_dim, s_enc_out_dim, inv_h_dim, fwd_h_dim):
    """PyTorch nn.Linear-style uniform(+-1/sqrt(fan_in)) init; weights as [in, out]."""
    ks = iter(jax.random.split(key, 16))

    def lin(fan_in, fan_out):
        bound = 1.0 / float(fan_in) ** 0.5
        w = jax.random.uniform(next(ks), (fan_in, fan_out), jnp.float32, -bound, bound)
        b = jax.random.uniform(next(ks), (1, fan_out), jnp.float32, -bound, bound)
        return w, b

    p = {}
    p["we1"], p["be1"] = lin(a_dim, s_enc_out_dim)
    p["we2"], p["be2"] = lin(s_enc_out_dim, s_enc_out_dim)
    p["wi1"], p["bi1"] = lin(2 * s_enc_out_dim, inv_h_dim)
    p["wi2"], p["bi2"] = lin(inv_h_dim, inv_h_dim)
    p["wi3"], p["bi3"] = lin(inv_h_dim, a_dim)
    p["wf1"], p["bf1"] = lin(s_enc_out_dim + a_dim, fwd_h_dim)
    p["wf2"], p["bf2"] = lin(fwd_h_dim, fwd_h_dim)
    p["wf3"], p["bf3"] = lin(fwd_h_dim, s_enc_out_dim)
    return p


def ic_da_reference(state_vec, action_vec, next_state_vec, p):
    """Pure-JAX reference mirroring the kernel's bf16-operand / f32-accumulate math."""
    q = lambda x: x.astype(jnp.bfloat16).astype(jnp.float32)
    dot = lambda x, w: jnp.dot(q(x), q(w), precision=jax.lax.Precision.HIGHEST)

    def enc(x):
        h = jnp.maximum(dot(x, p["we1"]) + p["be1"], 0.0)
        return dot(h, p["we2"]) + p["be2"]

    phi_s = enc(state_vec)
    phi_ns = enc(next_state_vec)

    phi_cat = jnp.concatenate([phi_s, phi_ns], axis=-1)
    h = jnp.maximum(dot(phi_cat, p["wi1"]) + p["bi1"], 0.0)
    h = jnp.maximum(dot(h, p["wi2"]) + p["bi2"], 0.0)
    logits = dot(h, p["wi3"]) + p["bi3"]
    action_vec_est = 1.0 / (1.0 + jnp.exp(-logits))

    sa_cat = jnp.concatenate([phi_s, action_vec], axis=-1)
    h = jnp.maximum(dot(sa_cat, p["wf1"]) + p["bf1"], 0.0)
    h = jnp.maximum(dot(h, p["wf2"]) + p["bf2"], 0.0)
    phi_ns_est = dot(h, p["wf3"]) + p["bf3"]
    return action_vec_est, phi_ns, phi_ns_est


if __name__ == "__main__":
    # TODO(synk): MultiWozVector vocab loading / action_vectorize (string dialogue
    # acts -> multi-hot vectors) is host-side preprocessing with no Pallas
    # equivalent; the kernel consumes already-vectorized [B, a_dim] inputs.
    B = 16
    a_dim = 32
    s_enc_out_dim = 32
    inv_h_dim = 32
    fwd_h_dim = 32

    key = jax.random.PRNGKey(0)
    k_s, k_a, k_ns, k_p = jax.random.split(key, 4)
    # dialogue-act vectors are multi-hot {0,1}
    state_vec = (jax.random.uniform(k_s, (B, a_dim)) < 0.2).astype(jnp.float32)
    action_vec = (jax.random.uniform(k_a, (B, a_dim)) < 0.2).astype(jnp.float32)
    next_state_vec = (jax.random.uniform(k_ns, (B, a_dim)) < 0.2).astype(jnp.float32)

    params = init_ic_da_params(k_p, a_dim, s_enc_out_dim, inv_h_dim, fwd_h_dim)

    out = ic_da_forward(state_vec, action_vec, next_state_vec, params)
    out = jax.block_until_ready(out)
    action_vec_est, phi_ns, phi_ns_est = out

    ref = ic_da_reference(state_vec, action_vec, next_state_vec, params)

    assert action_vec_est.shape == (B, a_dim), action_vec_est.shape
    assert phi_ns.shape == (B, s_enc_out_dim), phi_ns.shape
    assert phi_ns_est.shape == (B, s_enc_out_dim), phi_ns_est.shape
    for got, want in zip(out, ref):
        err = float(jnp.max(jnp.abs(got - want)))
        assert jnp.allclose(got, want, atol=2e-3, rtol=2e-3), f"mismatch, max abs err {err}"

    print("KERNEL_OK")
</pallas_src>

<mosaic_0001>
module attributes {stable_mosaic.version = 11 : i64} {
  func.func @ic_da_kernel(%arg0: i32, %arg1: memref<8x128xbf16, #tpu.memory_space<vmem>>, %arg2: memref<8x128xbf16, #tpu.memory_space<vmem>>, %arg3: memref<8x128xbf16, #tpu.memory_space<vmem>>, %arg4: memref<128x128xbf16, #tpu.memory_space<vmem>>, %arg5: memref<1x128xf32, #tpu.memory_space<vmem>>, %arg6: memref<128x128xbf16, #tpu.memory_space<vmem>>, %arg7: memref<1x128xf32, #tpu.memory_space<vmem>>, %arg8: memref<128x128xbf16, #tpu.memory_space<vmem>>, %arg9: memref<128x128xbf16, #tpu.memory_space<vmem>>, %arg10: memref<1x128xf32, #tpu.memory_space<vmem>>, %arg11: memref<128x128xbf16, #tpu.memory_space<vmem>>, %arg12: memref<1x128xf32, #tpu.memory_space<vmem>>, %arg13: memref<128x128xbf16, #tpu.memory_space<vmem>>, %arg14: memref<1x128xf32, #tpu.memory_space<vmem>>, %arg15: memref<128x128xbf16, #tpu.memory_space<vmem>>, %arg16: memref<128x128xbf16, #tpu.memory_space<vmem>>, %arg17: memref<1x128xf32, #tpu.memory_space<vmem>>, %arg18: memref<128x128xbf16, #tpu.memory_space<vmem>>, %arg19: memref<1x128xf32, #tpu.memory_space<vmem>>, %arg20: memref<128x128xbf16, #tpu.memory_space<vmem>>, %arg21: memref<1x128xf32, #tpu.memory_space<vmem>>, %arg22: memref<8x128xf32, #tpu.memory_space<vmem>>, %arg23: memref<8x128xf32, #tpu.memory_space<vmem>>, %arg24: memref<8x128xf32, #tpu.memory_space<vmem>>) attributes {dimension_semantics = [#tpu.dimension_semantics<parallel>], iteration_bounds = array<i64: 2>, scalar_prefetch = 0 : i64, scratch_operands = 0 : i64, tpu.core_type = #tpu.core_type<tc>, window_params = [{transform_indices = @transform_0, window_bounds = array<i64: 8, 128>}, {transform_indices = @transform_1, window_bounds = array<i64: 8, 128>}, {transform_indices = @transform_2, window_bounds = array<i64: 8, 128>}, {pipeline_mode = #tpu.pipeline_mode<synchronous>, transform_indices = @transform_3, window_bounds = array<i64: 128, 128>}, {pipeline_mode = #tpu.pipeline_mode<synchronous>, transform_indices = @transform_4, window_bounds = array<i64: 1, 128>}, {pipeline_mode = #tpu.pipeline_mode<synchronous>, transform_indices = @transform_5, window_bounds = array<i64: 128, 128>}, {pipeline_mode = #tpu.pipeline_mode<synchronous>, transform_indices = @transform_6, window_bounds = array<i64: 1, 128>}, {pipeline_mode = #tpu.pipeline_mode<synchronous>, transform_indices = @transform_7, window_bounds = array<i64: 128, 128>}, {pipeline_mode = #tpu.pipeline_mode<synchronous>, transform_indices = @transform_8, window_bounds = array<i64: 128, 128>}, {pipeline_mode = #tpu.pipeline_mode<synchronous>, transform_indices = @transform_9, window_bounds = array<i64: 1, 128>}, {pipeline_mode = #tpu.pipeline_mode<synchronous>, transform_indices = @transform_10, window_bounds = array<i64: 128, 128>}, {pipeline_mode = #tpu.pipeline_mode<synchronous>, transform_indices = @transform_11, window_bounds = array<i64: 1, 128>}, {pipeline_mode = #tpu.pipeline_mode<synchronous>, transform_indices = @transform_12, window_bounds = array<i64: 128, 128>}, {pipeline_mode = #tpu.pipeline_mode<synchronous>, transform_indices = @transform_13, window_bounds = array<i64: 1, 128>}, {pipeline_mode = #tpu.pipeline_mode<synchronous>, transform_indices = @transform_14, window_bounds = array<i64: 128, 128>}, {pipeline_mode = #tpu.pipeline_mode<synchronous>, transform_indices = @transform_15, window_bounds = array<i64: 128, 128>}, {pipeline_mode = #tpu.pipeline_mode<synchronous>, transform_indices = @transform_16, window_bounds = array<i64: 1, 128>}, {pipeline_mode = #tpu.pipeline_mode<synchronous>, transform_indices = @transform_17, window_bounds = array<i64: 128, 128>}, {pipeline_mode = #tpu.pipeline_mode<synchronous>, transform_indices = @transform_18, window_bounds = array<i64: 1, 128>}, {pipeline_mode = #tpu.pipeline_mode<synchronous>, transform_indices = @transform_19, window_bounds = array<i64: 128, 128>}, {pipeline_mode = #tpu.pipeline_mode<synchronous>, transform_indices = @transform_20, window_bounds = array<i64: 1, 128>}, {transform_indices = @transform_21, window_bounds = array<i64: 8, 128>}, {transform_indices = @transform_22, window_bounds = array<i64: 8, 128>}, {transform_indices = @transform_23, window_bounds = array<i64: 8, 128>}]} {
    %c0 = arith.constant 0 : index
    %c0_0 = arith.constant 0 : index
    %0 = vector.load %arg1[%c0, %c0_0] : memref<8x128xbf16, #tpu.memory_space<vmem>>, vector<8x128xbf16>
    %c0_1 = arith.constant 0 : index
    %c0_2 = arith.constant 0 : index
    %1 = vector.load %arg4[%c0_1, %c0_2] : memref<128x128xbf16, #tpu.memory_space<vmem>>, vector<128x128xbf16>
    %cst = arith.constant dense<0.000000e+00> : vector<8x128xf32>
    %2 = tpu.matmul %0, %1, %cst {dimension_numbers = #tpu.dot_dimension_numbers<[1], [0], [0], [1], [0, 0, 1, 1], [], []>} : vector<8x128xbf16>, vector<128x128xbf16>, vector<8x128xf32> -> vector<8x128xf32>
    %c0_3 = arith.constant 0 : index
    %c0_4 = arith.constant 0 : index
    %3 = vector.load %arg5[%c0_3, %c0_4] : memref<1x128xf32, #tpu.memory_space<vmem>>, vector<1x128xf32>
    %4 = vector.broadcast %3 : vector<1x128xf32> to vector<8x128xf32>
    %5 = arith.addf %2, %4 : vector<8x128xf32>
    %cst_5 = arith.constant 0.000000e+00 : f32
    %6 = vector.broadcast %cst_5 : f32 to vector<8x128xf32>
    %7 = arith.maximumf %5, %6 : vector<8x128xf32>
    %8 = arith.truncf %7 : vector<8x128xf32> to vector<8x128xbf16>
    %c0_6 = arith.constant 0 : index
    %c0_7 = arith.constant 0 : index
    %9 = vector.load %arg6[%c0_6, %c0_7] : memref<128x128xbf16, #tpu.memory_space<vmem>>, vector<128x128xbf16>
    %cst_8 = arith.constant dense<0.000000e+00> : vector<8x128xf32>
    %10 = tpu.matmul %8, %9, %cst_8 {dimension_numbers = #tpu.dot_dimension_numbers<[1], [0], [0], [1], [0, 0, 1, 1], [], []>} : vector<8x128xbf16>, vector<128x128xbf16>, vector<8x128xf32> -> vector<8x128xf32>
    %c0_9 = arith.constant 0 : index
    %c0_10 = arith.constant 0 : index
    %11 = vector.load %arg7[%c0_9, %c0_10] : memref<1x128xf32, #tpu.memory_space<vmem>>, vector<1x128xf32>
    %12 = vector.broadcast %11 : vector<1x128xf32> to vector<8x128xf32>
    %13 = arith.addf %10, %12 : vector<8x128xf32>
    %c0_11 = arith.constant 0 : index
    %c0_12 = arith.constant 0 : index
    %14 = vector.load %arg2[%c0_11, %c0_12] : memref<8x128xbf16, #tpu.memory_space<vmem>>, vector<8x128xbf16>
    %c0_13 = arith.constant 0 : index
    %c0_14 = arith.constant 0 : index
    %15 = vector.load %arg4[%c0_13, %c0_14] : memref<128x128xbf16, #tpu.memory_space<vmem>>, vector<128x128xbf16>
    %cst_15 = arith.constant dense<0.000000e+00> : vector<8x128xf32>
    %16 = tpu.matmul %14, %15, %cst_15 {dimension_numbers = #tpu.dot_dimension_numbers<[1], [0], [0], [1], [0, 0, 1, 1], [], []>} : vector<8x128xbf16>, vector<128x128xbf16>, vector<8x128xf32> -> vector<8x128xf32>
    %c0_16 = arith.constant 0 : index
    %c0_17 = arith.constant 0 : index
    %17 = vector.load %arg5[%c0_16, %c0_17] : memref<1x128xf32, #tpu.memory_space<vmem>>, vector<1x128xf32>
    %18 = vector.broadcast %17 : vector<1x128xf32> to vector<8x128xf32>
    %19 = arith.addf %16, %18 : vector<8x128xf32>
    %cst_18 = arith.constant 0.000000e+00 : f32
    %20 = vector.broadcast %cst_18 : f32 to vector<8x128xf32>
    %21 = arith.maximumf %19, %20 : vector<8x128xf32>
    %22 = arith.truncf %21 : vector<8x128xf32> to vector<8x128xbf16>
    %c0_19 = arith.constant 0 : index
    %c0_20 = arith.constant 0 : index
    %23 = vector.load %arg6[%c0_19, %c0_20] : memref<128x128xbf16, #tpu.memory_space<vmem>>, vector<128x128xbf16>
    %cst_21 = arith.constant dense<0.000000e+00> : vector<8x128xf32>
    %24 = tpu.matmul %22, %23, %cst_21 {dimension_numbers = #tpu.dot_dimension_numbers<[1], [0], [0], [1], [0, 0, 1, 1], [], []>} : vector<8x128xbf16>, vector<128x128xbf16>, vector<8x128xf32> -> vector<8x128xf32>
    %c0_22 = arith.constant 0 : index
    %c0_23 = arith.constant 0 : index
    %25 = vector.load %arg7[%c0_22, %c0_23] : memref<1x128xf32, #tpu.memory_space<vmem>>, vector<1x128xf32>
    %26 = vector.broadcast %25 : vector<1x128xf32> to vector<8x128xf32>
    %27 = arith.addf %24, %26 : vector<8x128xf32>
    %c0_24 = arith.constant 0 : index
    %c0_25 = arith.constant 0 : index
    %28 = vector.load %arg23[%c0_24, %c0_25] : memref<8x128xf32, #tpu.memory_space<vmem>>, vector<8x128xf32>
    tpu.vector_store %arg23[%c0_24, %c0_25], %27 {strides = array<i32>} : memref<8x128xf32, #tpu.memory_space<vmem>>, vector<8x128xf32>,
    %29 = arith.truncf %13 : vector<8x128xf32> to vector<8x128xbf16>
    %30 = arith.truncf %27 : vector<8x128xf32> to vector<8x128xbf16>
    %c0_26 = arith.constant 0 : index
    %c0_27 = arith.constant 0 : index
    %31 = vector.load %arg8[%c0_26, %c0_27] : memref<128x128xbf16, #tpu.memory_space<vmem>>, vector<128x128xbf16>
    %cst_28 = arith.constant dense<0.000000e+00> : vector<8x128xf32>
    %32 = tpu.matmul %29, %31, %cst_28 {dimension_numbers = #tpu.dot_dimension_numbers<[1], [0], [0], [1], [0, 0, 1, 1], [], []>} : vector<8x128xbf16>, vector<128x128xbf16>, vector<8x128xf32> -> vector<8x128xf32>
    %c0_29 = arith.constant 0 : index
    %c0_30 = arith.constant 0 : index
    %33 = vector.load %arg9[%c0_29, %c0_30] : memref<128x128xbf16, #tpu.memory_space<vmem>>, vector<128x128xbf16>
    %cst_31 = arith.constant dense<0.000000e+00> : vector<8x128xf32>
    %34 = tpu.matmul %30, %33, %cst_31 {dimension_numbers = #tpu.dot_dimension_numbers<[1], [0], [0], [1], [0, 0, 1, 1], [], []>} : vector<8x128xbf16>, vector<128x128xbf16>, vector<8x128xf32> -> vector<8x128xf32>
    %35 = arith.addf %32, %34 : vector<8x128xf32>
    %c0_32 = arith.constant 0 : index
    %c0_33 = arith.constant 0 : index
    %36 = vector.load %arg10[%c0_32, %c0_33] : memref<1x128xf32, #tpu.memory_space<vmem>>, vector<1x128xf32>
    %37 = vector.broadcast %36 : vector<1x128xf32> to vector<8x128xf32>
    %38 = arith.addf %35, %37 : vector<8x128xf32>
    %cst_34 = arith.constant 0.000000e+00 : f32
    %39 = vector.broadcast %cst_34 : f32 to vector<8x128xf32>
    %40 = arith.maximumf %38, %39 : vector<8x128xf32>
    %41 = arith.truncf %40 : vector<8x128xf32> to vector<8x128xbf16>
    %c0_35 = arith.constant 0 : index
    %c0_36 = arith.constant 0 : index
    %42 = vector.load %arg11[%c0_35, %c0_36] : memref<128x128xbf16, #tpu.memory_space<vmem>>, vector<128x128xbf16>
    %cst_37 = arith.constant dense<0.000000e+00> : vector<8x128xf32>
    %43 = tpu.matmul %41, %42, %cst_37 {dimension_numbers = #tpu.dot_dimension_numbers<[1], [0], [0], [1], [0, 0, 1, 1], [], []>} : vector<8x128xbf16>, vector<128x128xbf16>, vector<8x128xf32> -> vector<8x128xf32>
    %c0_38 = arith.constant 0 : index
    %c0_39 = arith.constant 0 : index
    %44 = vector.load %arg12[%c0_38, %c0_39] : memref<1x128xf32, #tpu.memory_space<vmem>>, vector<1x128xf32>
    %45 = vector.broadcast %44 : vector<1x128xf32> to vector<8x128xf32>
    %46 = arith.addf %43, %45 : vector<8x128xf32>
    %cst_40 = arith.constant 0.000000e+00 : f32
    %47 = vector.broadcast %cst_40 : f32 to vector<8x128xf32>
    %48 = arith.maximumf %46, %47 : vector<8x128xf32>
    %49 = arith.truncf %48 : vector<8x128xf32> to vector<8x128xbf16>
    %c0_41 = arith.constant 0 : index
    %c0_42 = arith.constant 0 : index
    %50 = vector.load %arg13[%c0_41, %c0_42] : memref<128x128xbf16, #tpu.memory_space<vmem>>, vector<128x128xbf16>
    %cst_43 = arith.constant dense<0.000000e+00> : vector<8x128xf32>
    %51 = tpu.matmul %49, %50, %cst_43 {dimension_numbers = #tpu.dot_dimension_numbers<[1], [0], [0], [1], [0, 0, 1, 1], [], []>} : vector<8x128xbf16>, vector<128x128xbf16>, vector<8x128xf32> -> vector<8x128xf32>
    %c0_44 = arith.constant 0 : index
    %c0_45 = arith.constant 0 : index
    %52 = vector.load %arg14[%c0_44, %c0_45] : memref<1x128xf32, #tpu.memory_space<vmem>>, vector<1x128xf32>
    %53 = vector.broadcast %52 : vector<1x128xf32> to vector<8x128xf32>
    %54 = arith.addf %51, %53 : vector<8x128xf32>
    %cst_46 = arith.constant 0.000000e+00 : f32
    %55 = vector.broadcast %cst_46 : f32 to vector<8x128xf32>
    %56 = arith.subf %55, %54 : vector<8x128xf32>
    %57 = math.exp %56 : vector<8x128xf32>
    %cst_47 = arith.constant 1.000000e+00 : f32
    %58 = vector.broadcast %cst_47 : f32 to vector<8x128xf32>
    %59 = arith.addf %58, %57 : vector<8x128xf32>
    %cst_48 = arith.constant 1.000000e+00 : f32
    %60 = vector.broadcast %cst_48 : f32 to vector<8x128xf32>
    %61 = arith.divf %60, %59 : vector<8x128xf32>
    %c0_49 = arith.constant 0 : index
    %c0_50 = arith.constant 0 : index
    %62 = vector.load %arg22[%c0_49, %c0_50] : memref<8x128xf32, #tpu.memory_space<vmem>>, vector<8x128xf32>
    tpu.vector_store %arg22[%c0_49, %c0_50], %61 {strides = array<i32>} : memref<8x128xf32, #tpu.memory_space<vmem>>, vector<8x128xf32>,
    %c0_51 = arith.constant 0 : index
    %c0_52 = arith.constant 0 : index
    %63 = vector.load %arg15[%c0_51, %c0_52] : memref<128x128xbf16, #tpu.memory_space<vmem>>, vector<128x128xbf16>
    %cst_53 = arith.constant dense<0.000000e+00> : vector<8x128xf32>
    %64 = tpu.matmul %29, %63, %cst_53 {dimension_numbers = #tpu.dot_dimension_numbers<[1], [0], [0], [1], [0, 0, 1, 1], [], []>} : vector<8x128xbf16>, vector<128x128xbf16>, vector<8x128xf32> -> vector<8x128xf32>
    %c0_54 = arith.constant 0 : index
    %c0_55 = arith.constant 0 : index
    %65 = vector.load %arg3[%c0_54, %c0_55] : memref<8x128xbf16, #tpu.memory_space<vmem>>, vector<8x128xbf16>
    %c0_56 = arith.constant 0 : index
    %c0_57 = arith.constant 0 : index
    %66 = vector.load %arg16[%c0_56, %c0_57] : memref<128x128xbf16, #tpu.memory_space<vmem>>, vector<128x128xbf16>
    %cst_58 = arith.constant dense<0.000000e+00> : vector<8x128xf32>
    %67 = tpu.matmul %65, %66, %cst_58 {dimension_numbers = #tpu.dot_dimension_numbers<[1], [0], [0], [1], [0, 0, 1, 1], [], []>} : vector<8x128xbf16>, vector<128x128xbf16>, vector<8x128xf32> -> vector<8x128xf32>
    %68 = arith.addf %64, %67 : vector<8x128xf32>
    %c0_59 = arith.constant 0 : index
    %c0_60 = arith.constant 0 : index
    %69 = vector.load %arg17[%c0_59, %c0_60] : memref<1x128xf32, #tpu.memory_space<vmem>>, vector<1x128xf32>
    %70 = vector.broadcast %69 : vector<1x128xf32> to vector<8x128xf32>
    %71 = arith.addf %68, %70 : vector<8x128xf32>
    %cst_61 = arith.constant 0.000000e+00 : f32
    %72 = vector.broadcast %cst_61 : f32 to vector<8x128xf32>
    %73 = arith.maximumf %71, %72 : vector<8x128xf32>
    %74 = arith.truncf %73 : vector<8x128xf32> to vector<8x128xbf16>
    %c0_62 = arith.constant 0 : index
    %c0_63 = arith.constant 0 : index
    %75 = vector.load %arg18[%c0_62, %c0_63] : memref<128x128xbf16, #tpu.memory_space<vmem>>, vector<128x128xbf16>
    %cst_64 = arith.constant dense<0.000000e+00> : vector<8x128xf32>
    %76 = tpu.matmul %74, %75, %cst_64 {dimension_numbers = #tpu.dot_dimension_numbers<[1], [0], [0], [1], [0, 0, 1, 1], [], []>} : vector<8x128xbf16>, vector<128x128xbf16>, vector<8x128xf32> -> vector<8x128xf32>
    %c0_65 = arith.constant 0 : index
    %c0_66 = arith.constant 0 : index
    %77 = vector.load %arg19[%c0_65, %c0_66] : memref<1x128xf32, #tpu.memory_space<vmem>>, vector<1x128xf32>
    %78 = vector.broadcast %77 : vector<1x128xf32> to vector<8x128xf32>
    %79 = arith.addf %76, %78 : vector<8x128xf32>
    %cst_67 = arith.constant 0.000000e+00 : f32
    %80 = vector.broadcast %cst_67 : f32 to vector<8x128xf32>
    %81 = arith.maximumf %79, %80 : vector<8x128xf32>
    %82 = arith.truncf %81 : vector<8x128xf32> to vector<8x128xbf16>
    %c0_68 = arith.constant 0 : index
    %c0_69 = arith.constant 0 : index
    %83 = vector.load %arg20[%c0_68, %c0_69] : memref<128x128xbf16, #tpu.memory_space<vmem>>, vector<128x128xbf16>
    %cst_70 = arith.constant dense<0.000000e+00> : vector<8x128xf32>
    %84 = tpu.matmul %82, %83, %cst_70 {dimension_numbers = #tpu.dot_dimension_numbers<[1], [0], [0], [1], [0, 0, 1, 1], [], []>} : vector<8x128xbf16>, vector<128x128xbf16>, vector<8x128xf32> -> vector<8x128xf32>
    %c0_71 = arith.constant 0 : index
    %c0_72 = arith.constant 0 : index
    %85 = vector.load %arg21[%c0_71, %c0_72] : memref<1x128xf32, #tpu.memory_space<vmem>>, vector<1x128xf32>
    %86 = vector.broadcast %85 : vector<1x128xf32> to vector<8x128xf32>
    %87 = arith.addf %84, %86 : vector<8x128xf32>
    %c0_73 = arith.constant 0 : index
    %c0_74 = arith.constant 0 : index
    %88 = vector.load %arg24[%c0_73, %c0_74] : memref<8x128xf32, #tpu.memory_space<vmem>>, vector<8x128xf32>
    tpu.vector_store %arg24[%c0_73, %c0_74], %87 {strides = array<i32>} : memref<8x128xf32, #tpu.memory_space<vmem>>, vector<8x128xf32>,
    return
  }
  func.func @transform_0(%arg0: i32) -> (i32, i32) {
    %c0_i32 = arith.constant 0 : i32
    %c0_i32_0 = arith.constant 0 : i32
    return %arg0, %c0_i32 : i32, i32
  }
  func.func @transform_1(%arg0: i32) -> (i32, i32) {
    %c0_i32 = arith.constant 0 : i32
    %c0_i32_0 = arith.constant 0 : i32
    return %arg0, %c0_i32 : i32, i32
  }
  func.func @transform_2(%arg0: i32) -> (i32, i32) {
    %c0_i32 = arith.constant 0 : i32
    %c0_i32_0 = arith.constant 0 : i32
    return %arg0, %c0_i32 : i32, i32
  }
  func.func @transform_3(%arg0: i32) -> (i32, i32) {
    %c0_i32 = arith.constant 0 : i32
    %c0_i32_0 = arith.constant 0 : i32
    %c0_i32_1 = arith.constant 0 : i32
    return %c0_i32, %c0_i32_0 : i32, i32
  }
  func.func @transform_4(%arg0: i32) -> (i32, i32) {
    %c0_i32 = arith.constant 0 : i32
    %c0_i32_0 = arith.constant 0 : i32
    %c0_i32_1 = arith.constant 0 : i32
    return %c0_i32, %c0_i32_0 : i32, i32
  }
  func.func @transform_5(%arg0: i32) -> (i32, i32) {
    %c0_i32 = arith.constant 0 : i32
    %c0_i32_0 = arith.constant 0 : i32
    %c0_i32_1 = arith.constant 0 : i32
    return %c0_i32, %c0_i32_0 : i32, i32
  }
  func.func @transform_6(%arg0: i32) -> (i32, i32) {
    %c0_i32 = arith.constant 0 : i32
    %c0_i32_0 = arith.constant 0 : i32
    %c0_i32_1 = arith.constant 0 : i32
    return %c0_i32, %c0_i32_0 : i32, i32
  }
  func.func @transform_7(%arg0: i32) -> (i32, i32) {
    %c0_i32 = arith.constant 0 : i32
    %c0_i32_0 = arith.constant 0 : i32
    %c0_i32_1 = arith.constant 0 : i32
    return %c0_i32, %c0_i32_0 : i32, i32
  }
  func.func @transform_8(%arg0: i32) -> (i32, i32) {
    %c0_i32 = arith.constant 0 : i32
    %c0_i32_0 = arith.constant 0 : i32
    %c0_i32_1 = arith.constant 0 : i32
    return %c0_i32, %c0_i32_0 : i32, i32
  }
  func.func @transform_9(%arg0: i32) -> (i32, i32) {
    %c0_i32 = arith.constant 0 : i32
    %c0_i32_0 = arith.constant 0 : i32
    %c0_i32_1 = arith.constant 0 : i32
    return %c0_i32, %c0_i32_0 : i32, i32
  }
  func.func @transform_10(%arg0: i32) -> (i32, i32) {
    %c0_i32 = arith.constant 0 : i32
    %c0_i32_0 = arith.constant 0 : i32
    %c0_i32_1 = arith.constant 0 : i32
    return %c0_i32, %c0_i32_0 : i32, i32
  }
  func.func @transform_11(%arg0: i32) -> (i32, i32) {
    %c0_i32 = arith.constant 0 : i32
    %c0_i32_0 = arith.constant 0 : i32
    %c0_i32_1 = arith.constant 0 : i32
    return %c0_i32, %c0_i32_0 : i32, i32
  }
  func.func @transform_12(%arg0: i32) -> (i32, i32) {
    %c0_i32 = arith.constant 0 : i32
    %c0_i32_0 = arith.constant 0 : i32
    %c0_i32_1 = arith.constant 0 : i32
    return %c0_i32, %c0_i32_0 : i32, i32
  }
  func.func @transform_13(%arg0: i32) -> (i32, i32) {
    %c0_i32 = arith.constant 0 : i32
    %c0_i32_0 = arith.constant 0 : i32
    %c0_i32_1 = arith.constant 0 : i32
    return %c0_i32, %c0_i32_0 : i32, i32
  }
  func.func @transform_14(%arg0: i32) -> (i32, i32) {
    %c0_i32 = arith.constant 0 : i32
    %c0_i32_0 = arith.constant 0 : i32
    %c0_i32_1 = arith.constant 0 : i32
    return %c0_i32, %c0_i32_0 : i32, i32
  }
  func.func @transform_15(%arg0: i32) -> (i32, i32) {
    %c0_i32 = arith.constant 0 : i32
    %c0_i32_0 = arith.constant 0 : i32
    %c0_i32_1 = arith.constant 0 : i32
    return %c0_i32, %c0_i32_0 : i32, i32
  }
  func.func @transform_16(%arg0: i32) -> (i32, i32) {
    %c0_i32 = arith.constant 0 : i32
    %c0_i32_0 = arith.constant 0 : i32
    %c0_i32_1 = arith.constant 0 : i32
    return %c0_i32, %c0_i32_0 : i32, i32
  }
  func.func @transform_17(%arg0: i32) -> (i32, i32) {
    %c0_i32 = arith.constant 0 : i32
    %c0_i32_0 = arith.constant 0 : i32
    %c0_i32_1 = arith.constant 0 : i32
    return %c0_i32, %c0_i32_0 : i32, i32
  }
  func.func @transform_18(%arg0: i32) -> (i32, i32) {
    %c0_i32 = arith.constant 0 : i32
    %c0_i32_0 = arith.constant 0 : i32
    %c0_i32_1 = arith.constant 0 : i32
    return %c0_i32, %c0_i32_0 : i32, i32
  }
  func.func @transform_19(%arg0: i32) -> (i32, i32) {
    %c0_i32 = arith.constant 0 : i32
    %c0_i32_0 = arith.constant 0 : i32
    %c0_i32_1 = arith.constant 0 : i32
    return %c0_i32, %c0_i32_0 : i32, i32
  }
  func.func @transform_20(%arg0: i32) -> (i32, i32) {
    %c0_i32 = arith.constant 0 : i32
    %c0_i32_0 = arith.constant 0 : i32
    %c0_i32_1 = arith.constant 0 : i32
    return %c0_i32, %c0_i32_0 : i32, i32
  }
  func.func @transform_21(%arg0: i32) -> (i32, i32) {
    %c0_i32 = arith.constant 0 : i32
    %c0_i32_0 = arith.constant 0 : i32
    return %arg0, %c0_i32 : i32, i32
  }
  func.func @transform_22(%arg0: i32) -> (i32, i32) {
    %c0_i32 = arith.constant 0 : i32
    %c0_i32_0 = arith.constant 0 : i32
    return %arg0, %c0_i32 : i32, i32
  }
  func.func @transform_23(%arg0: i32) -> (i32, i32) {
    %c0_i32 = arith.constant 0 : i32
    %c0_i32_0 = arith.constant 0 : i32
    return %arg0, %c0_i32 : i32, i32
  }
}

</mosaic_0001>

<llo_original>
// kernel: tpu_custom_call.1
$region0: #{tpu_custom_call.1}
  #allocation0 [shape = 'u32[]', space=smem, size = 0x4, offset = 0x4, fixed_abs, tag = 'smem constant byte address 0x4 - core index']
  #allocation1 [shape = 'u32[144,128]{1,0:T(1,128)}', space=vmem, size = 0x12000, scoped, tag = 'internal scratch']
  %s0 = inlined_call_operand.hbm [shape: bf16[16,128], index: 0, kind: input, shape index: {}]
  %s1 = inlined_call_operand.hbm [shape: bf16[16,128], index: 1, kind: input, shape index: {}]
  %s2 = inlined_call_operand.hbm [shape: bf16[16,128], index: 2, kind: input, shape index: {}]
  %s3 = inlined_call_operand.hbm [shape: bf16[128,128], index: 3, kind: input, shape index: {}]
  %s4 = inlined_call_operand.vmem [shape: f32[1,128], index: 4, kind: input, shape index: {}]
  %s5 = inlined_call_operand.hbm [shape: bf16[128,128], index: 5, kind: input, shape index: {}]
  %s6 = inlined_call_operand.vmem [shape: f32[1,128], index: 6, kind: input, shape index: {}]
  %s7 = inlined_call_operand.hbm [shape: bf16[128,128], index: 7, kind: input, shape index: {}]
  %s8 = inlined_call_operand.hbm [shape: bf16[128,128], index: 8, kind: input, shape index: {}]
  %s9 = inlined_call_operand.vmem [shape: f32[1,128], index: 9, kind: input, shape index: {}]
  %s10 = inlined_call_operand.hbm [shape: bf16[128,128], index: 10, kind: input, shape index: {}]
  %s11 = inlined_call_operand.vmem [shape: f32[1,128], index: 11, kind: input, shape index: {}]
  %s12 = inlined_call_operand.hbm [shape: bf16[128,128], index: 12, kind: input, shape index: {}]
  %s13 = inlined_call_operand.vmem [shape: f32[1,128], index: 13, kind: input, shape index: {}]
  %s14 = inlined_call_operand.hbm [shape: bf16[128,128], index: 14, kind: input, shape index: {}]
  %s15 = inlined_call_operand.hbm [shape: bf16[128,128], index: 15, kind: input, shape index: {}]
  %s16 = inlined_call_operand.vmem [shape: f32[1,128], index: 16, kind: input, shape index: {}]
  %s17 = inlined_call_operand.hbm [shape: bf16[128,128], index: 17, kind: input, shape index: {}]
  %s18 = inlined_call_operand.vmem [shape: f32[1,128], index: 18, kind: input, shape index: {}]
  %s19 = inlined_call_operand.hbm [shape: bf16[128,128], index: 19, kind: input, shape index: {}]
  %s20 = inlined_call_operand.vmem [shape: f32[1,128], index: 20, kind: input, shape index: {}]
  %s21 = inlined_call_operand.hbm [shape: f32[16,128], index: 21, kind: output, shape index: {0}]
  %s22 = inlined_call_operand.hbm [shape: f32[16,128], index: 22, kind: output, shape index: {1}]
  %s23 = inlined_call_operand.hbm [shape: f32[16,128], index: 23, kind: output, shape index: {2}]
  %24 = xla_tuple %s21, %s22, %s23
  %s25 = sld [smem:[#allocation0]]
  $region185: #{tpu_custom_call.1} parent=0
    _
  %s27 = ssub.s32 1, %s25
  %s28 = scalar_select 0, %s27, %s25
  $region1: #{tpu_custom_call.1} parent=0
    #allocation2 [shape = 'u8[4096]{0}', space=vmem, size = 0x1000, scoped, tag = 'input window, operand 0']
    #allocation3 [shape = 's32[2]{0}', space=sflag, size = 0x8, scoped, tag = 'scoped memory for tpu_custom_call.1']
    #allocation4 [shape = 's32[2]{0}', space=sflag, size = 0x8, scoped, tag = 'scoped memory for tpu_custom_call.1']
    #allocation5 [shape = 'u8[4096]{0}', space=vmem, size = 0x1000, scoped, tag = 'input window, operand 1']
    #allocation6 [shape = 's32[2]{0}', space=sflag, size = 0x8, scoped, tag = 'scoped memory for tpu_custom_call.1']
    #allocation7 [shape = 'u8[4096]{0}', space=vmem, size = 0x1000, scoped, tag = 'input window, operand 2']
    #allocation8 [shape = 'u8[32768]{0}', space=vmem, size = 0x8000, scoped, tag = 'input window, operand 3, single buffered']
    #allocation9 [shape = 's32[1]{0}', space=sflag, size = 0x4, scoped, tag = 'scoped memory for tpu_custom_call.1']
    #allocation10 [shape = 'u8[32768]{0}', space=vmem, size = 0x8000, scoped, tag = 'input window, operand 5, single buffered']
    #allocation11 [shape = 'u8[32768]{0}', space=vmem, size = 0x8000, scoped, tag = 'input window, operand 7, single buffered']
    #allocation12 [shape = 's32[1]{0}', space=sflag, size = 0x4, scoped, tag = 'scoped memory for tpu_custom_call.1']
    #allocation13 [shape = 'u8[32768]{0}', space=vmem, size = 0x8000, scoped, tag = 'input window, operand 8, single buffered']
    #allocation14 [shape = 'u8[32768]{0}', space=vmem, size = 0x8000, scoped, tag = 'input window, operand 10, single buffered']
    #allocation15 [shape = 's32[1]{0}', space=sflag, size = 0x4, scoped, tag = 'scoped memory for tpu_custom_call.1']
    #allocation16 [shape = 'u8[32768]{0}', space=vmem, size = 0x8000, scoped, tag = 'input window, operand 12, single buffered']
    #allocation17 [shape = 'u8[32768]{0}', space=vmem, size = 0x8000, scoped, tag = 'input window, operand 14, single buffered']
    #allocation18 [shape = 's32[1]{0}', space=sflag, size = 0x4, scoped, tag = 'scoped memory for tpu_custom_call.1']
    #allocation19 [shape = 'u8[32768]{0}', space=vmem, size = 0x8000, scoped, tag = 'input window, operand 15, single buffered']
    #allocation20 [shape = 'u8[32768]{0}', space=vmem, size = 0x8000, scoped, tag = 'input window, operand 17, single buffered']
    #allocation21 [shape = 's32[1]{0}', space=sflag, size = 0x4, scoped, tag = 'scoped memory for tpu_custom_call.1']
    #allocation22 [shape = 'u8[32768]{0}', space=vmem, size = 0x8000, scoped, tag = 'input window, operand 19, single buffered']
    #allocation23 [shape = 'u8[8192]{0}', space=vmem, size = 0x2000, scoped, tag = 'output window, operand 0']
    #allocation24 [shape = 'u8[8192]{0}', space=vmem, size = 0x2000, scoped, tag = 'output window, operand 1']
    #allocation25 [shape = 's32[2]{0}', space=sflag, size = 0x8, scoped, tag = 'scoped memory for tpu_custom_call.1']
    #allocation26 [shape = 'u8[8192]{0}', space=vmem, size = 0x2000, scoped, tag = 'output window, operand 2']
    %29 = vsyncpa [#allocation3], 0
    %s30 = scalar_lea.sflag [#allocation3], 1
    %31 = vsyncpa %s30, 0
    %32 = vsyncpa [#allocation6], 0
    %s33 = scalar_lea.sflag [#allocation6], 1
    %34 = vsyncpa %s33, 0
    %35 = vsyncpa [#allocation9], 0
    %36 = vsyncpa [#allocation12], 0
    %37 = vsyncpa [#allocation15], 0
    %38 = vsyncpa [#allocation18], 0
    %39 = vsyncpa [#allocation21], 0
    %40 = vsyncpa [#allocation4], 0
    %s41 = scalar_lea.sflag [#allocation4], 1
    %42 = vsyncpa %s41, 0
    %43 = vsyncpa [#allocation25], 0
    %s44 = scalar_lea.sflag [#allocation25], 1
    %45 = vsyncpa %s44, 0
    loop: start=0, step=1, limit=4
    $region2: #{tpu_custom_call.1} parent=1 // loop_pre_header
      _
    $region3: #{tpu_custom_call.1} parent=1 // loop_header
      %s47 = sphi 0, %s51
      %p48 = scmp.ge.s32.totalorder %s47, 4
      %s57 = sphi 0, %s59
      %s60 = sphi 0, %s57
      %s61 = sphi 0, %s60
      %s77 = sphi 0, %s61
      %s83 = sphi 0, %s85
      %s86 = sphi 0, %s83
      %s87 = sphi 0, %s86
      %s103 = sphi 0, %s87
      %s109 = sphi 0, %s111
      %s112 = sphi 0, %s109
      %s113 = sphi 0, %s112
      %s129 = sphi 0, %s113
      %s133 = sphi 0, %s133
      %s135 = sphi 0, %s133
      %s136 = sphi 0, %s135
      %s150 = sphi 0, %s136
      %s154 = sphi 0, %s154
      %s156 = sphi 0, %s154
      %s157 = sphi 0, %s156
      %s171 = sphi 0, %s157
      %s175 = sphi 0, %s175
      %s177 = sphi 0, %s175
      %s178 = sphi 0, %s177
      %s192 = sphi 0, %s178
      %s196 = sphi 0, %s196
      %s198 = sphi 0, %s196
      %s199 = sphi 0, %s198
      %s213 = sphi 0, %s199
      %s217 = sphi 0, %s217
      %s219 = sphi 0, %s217
      %s220 = sphi 0, %s219
      %s234 = sphi 0, %s220
      %s238 = sphi 0, %s238
      %s240 = sphi 0, %s238
      %s241 = sphi 0, %s240
      %s255 = sphi 0, %s241
      %s259 = sphi 0, %s259
      %s261 = sphi 0, %s259
      %s262 = sphi 0, %s261
      %s276 = sphi 0, %s262
      %s280 = sphi 0, %s280
      %s282 = sphi 0, %s280
      %s283 = sphi 0, %s282
      %s297 = sphi 0, %s283
      %s301 = sphi 0, %s301
      %s303 = sphi 0, %s301
      %s304 = sphi 0, %s303
      %s318 = sphi 0, %s304
      %s322 = sphi 0, %s322
      %s324 = sphi 0, %s322
      %s325 = sphi 0, %s324
      %s339 = sphi 0, %s325
      %s343 = sphi 0, %s343
      %s345 = sphi 0, %s343
      %s346 = sphi 0, %s345
      %s360 = sphi 0, %s346
      %s364 = sphi 0, %s364
      %s366 = sphi 0, %s364
      %s367 = sphi 0, %s366
      %s381 = sphi 0, %s367
      %s385 = sphi 0, %s385
      %s387 = sphi 0, %s385
      %s388 = sphi 0, %s387
      %s402 = sphi 0, %s388
      %s406 = sphi 0, %s406
      %s408 = sphi 0, %s406
      %s409 = sphi 0, %s408
      %s423 = sphi 0, %s409
      %s427 = sphi 0, %s427
      %s429 = sphi 0, %s427
      %s430 = sphi 0, %s429
      %s444 = sphi 0, %s430
      %s448 = sphi 0, %s448
      %s450 = sphi 0, %s448
      %s451 = sphi 0, %s450
      %s465 = sphi 0, %s451
      %s469 = sphi 0, %s469
      %s471 = sphi 0, %s469
      %s472 = sphi 0, %s471
      %s486 = sphi 0, %s472
      %s490 = sphi 0, %s490
      %s492 = sphi 0, %s490
      %s493 = sphi 0, %s492
      %s507 = sphi 0, %s493
      %s513 = sphi 0, %s515
      %s516 = sphi 0, %s513
      %s517 = sphi 0, %s516
      %s533 = sphi 0, %s517
      %s539 = sphi 0, %s541
      %s542 = sphi 0, %s539
      %s543 = sphi 0, %s542
      %s559 = sphi 0, %s543
      %s565 = sphi 0, %s567
      %s568 = sphi 0, %s565
      %s569 = sphi 0, %s568
      %s585 = sphi 0, %s569
    $region4: #{tpu_custom_call.1} parent=1 // loop_header_branch
      %50 = sbr.rel (%p48) target = $region8
    $region5: #{tpu_custom_call.1} parent=1 // loop_body
      %s52 = ssub.s32 %s47, 1
      %s53 = ssub.s32 %s47, 2
      %s54 = sadd.s32 %s47, 1
      %s55 = ssub.s32 %s47, %s54
      %p56 = scmp.eq.s32.totalorder %s55, 0
      %s58 = sadd.s32 %s57, 1
      %s59 = scalar_select %p56, %s57, %s58
      %p62 = pneg %p56
      %p63 = scmp.eq.s32.totalorder %s47, 1
      %p64 = por %p62, %p63
      %p65 = scmp.ne.s32.totalorder %s57, %s60
      %p66 = scmp.eq.s32.totalorder %s47, 0
      %p67 = por %p65, %p66
      %p68 = scmp.ne.s32.totalorder %s57, %s60
      %p69 = scmp.eq.s32.totalorder %s52, 1
      %p70 = por %p68, %p69
      %p71 = scmp.ne.s32.totalorder %s60, %s61
      %p72 = scmp.eq.s32.totalorder %s52, 0
      %p73 = por %p71, %p72
      %p74 = scmp.ne.s32.totalorder %s60, %s61
      %p75 = scmp.eq.s32.totalorder %s53, 1
      %p76 = por %p74, %p75
      %p78 = scmp.ne.s32.totalorder %s61, %s77
      %p79 = scmp.eq.s32.totalorder %s53, 0
      %p80 = por %p78, %p79
      %s81 = ssub.s32 %s47, %s54
      %p82 = scmp.eq.s32.totalorder %s81, 0
      %s84 = sadd.s32 %s83, 1
      %s85 = scalar_select %p82, %s83, %s84
      %p88 = pneg %p82
      %p89 = scmp.eq.s32.totalorder %s47, 1
      %p90 = por %p88, %p89
      %p91 = scmp.ne.s32.totalorder %s83, %s86
      %p92 = scmp.eq.s32.totalorder %s47, 0
      %p93 = por %p91, %p92
      %p94 = scmp.ne.s32.totalorder %s83, %s86
      %p95 = scmp.eq.s32.totalorder %s52, 1
      %p96 = por %p94, %p95
      %p97 = scmp.ne.s32.totalorder %s86, %s87
      %p98 = scmp.eq.s32.totalorder %s52, 0
      %p99 = por %p97, %p98
      %p100 = scmp.ne.s32.totalorder %s86, %s87
      %p101 = scmp.eq.s32.totalorder %s53, 1
      %p102 = por %p100, %p101
      %p104 = scmp.ne.s32.totalorder %s87, %s103
      %p105 = scmp.eq.s32.totalorder %s53, 0
      %p106 = por %p104, %p105
      %s107 = ssub.s32 %s47, %s54
      %p108 = scmp.eq.s32.totalorder %s107, 0
      %s110 = sadd.s32 %s109, 1
      %s111 = scalar_select %p108, %s109, %s110
      %p114 = pneg %p108
      %p115 = scmp.eq.s32.totalorder %s47, 1
      %p116 = por %p114, %p115
      %p117 = scmp.ne.s32.totalorder %s109, %s112
      %p118 = scmp.eq.s32.totalorder %s47, 0
      %p119 = por %p117, %p118
      %p120 = scmp.ne.s32.totalorder %s109, %s112
      %p121 = scmp.eq.s32.totalorder %s52, 1
      %p122 = por %p120, %p121
      %p123 = scmp.ne.s32.totalorder %s112, %s113
      %p124 = scmp.eq.s32.totalorder %s52, 0
      %p125 = por %p123, %p124
      %p126 = scmp.ne.s32.totalorder %s112, %s113
      %p127 = scmp.eq.s32.totalorder %s53, 1
      %p128 = por %p126, %p127
      %p130 = scmp.ne.s32.totalorder %s113, %s129
      %p131 = scmp.eq.s32.totalorder %s53, 0
      %p132 = por %p130, %p131
      %s134 = sadd.s32 %s133, 1
      %p137 = scmp.eq.s32.totalorder %s47, 1
      %p138 = scmp.ne.s32.totalorder %s133, %s135
      %p139 = scmp.eq.s32.totalorder %s47, 0
      %p140 = por %p138, %p139
      %p141 = scmp.ne.s32.totalorder %s133, %s135
      %p142 = scmp.eq.s32.totalorder %s52, 1
      %p143 = por %p141, %p142
      %p144 = scmp.ne.s32.totalorder %s135, %s136
      %p145 = scmp.eq.s32.totalorder %s52, 0
      %p146 = por %p144, %p145
      %p147 = scmp.ne.s32.totalorder %s135, %s136
      %p148 = scmp.eq.s32.totalorder %s53, 1
      %p149 = por %p147, %p148
      %p151 = scmp.ne.s32.totalorder %s136, %s150
      %p152 = scmp.eq.s32.totalorder %s53, 0
      %p153 = por %p151, %p152
      %s155 = sadd.s32 %s154, 1
      %p158 = scmp.eq.s32.totalorder %s47, 1
      %p159 = scmp.ne.s32.totalorder %s154, %s156
      %p160 = scmp.eq.s32.totalorder %s47, 0
      %p161 = por %p159, %p160
      %p162 = scmp.ne.s32.totalorder %s154, %s156
      %p163 = scmp.eq.s32.totalorder %s52, 1
      %p164 = por %p162, %p163
      %p165 = scmp.ne.s32.totalorder %s156, %s157
      %p166 = scmp.eq.s32.totalorder %s52, 0
      %p167 = por %p165, %p166
      %p168 = scmp.ne.s32.totalorder %s156, %s157
      %p169 = scmp.eq.s32.totalorder %s53, 1
      %p170 = por %p168, %p169
      %p172 = scmp.ne.s32.totalorder %s157, %s171
      %p173 = scmp.eq.s32.totalorder %s53, 0
      %p174 = por %p172, %p173
      %s176 = sadd.s32 %s175, 1
      %p179 = scmp.eq.s32.totalorder %s47, 1
      %p180 = scmp.ne.s32.totalorder %s175, %s177
      %p181 = scmp.eq.s32.totalorder %s47, 0
      %p182 = por %p180, %p181
      %p183 = scmp.ne.s32.totalorder %s175, %s177
      %p184 = scmp.eq.s32.totalorder %s52, 1
      %p185 = por %p183, %p184
      %p186 = scmp.ne.s32.totalorder %s177, %s178
      %p187 = scmp.eq.s32.totalorder %s52, 0
      %p188 = por %p186, %p187
      %p189 = scmp.ne.s32.totalorder %s177, %s178
      %p190 = scmp.eq.s32.totalorder %s53, 1
      %p191 = por %p189, %p190
      %p193 = scmp.ne.s32.totalorder %s178, %s192
      %p194 = scmp.eq.s32.totalorder %s53, 0
      %p195 = por %p193, %p194
      %s197 = sadd.s32 %s196, 1
      %p200 = scmp.eq.s32.totalorder %s47, 1
      %p201 = scmp.ne.s32.totalorder %s196, %s198
      %p202 = scmp.eq.s32.totalorder %s47, 0
      %p203 = por %p201, %p202
      %p204 = scmp.ne.s32.totalorder %s196, %s198
      %p205 = scmp.eq.s32.totalorder %s52, 1
      %p206 = por %p204, %p205
      %p207 = scmp.ne.s32.totalorder %s198, %s199
      %p208 = scmp.eq.s32.totalorder %s52, 0
      %p209 = por %p207, %p208
      %p210 = scmp.ne.s32.totalorder %s198, %s199
      %p211 = scmp.eq.s32.totalorder %s53, 1
      %p212 = por %p210, %p211
      %p214 = scmp.ne.s32.totalorder %s199, %s213
      %p215 = scmp.eq.s32.totalorder %s53, 0
      %p216 = por %p214, %p215
      %s218 = sadd.s32 %s217, 1
      %p221 = scmp.eq.s32.totalorder %s47, 1
      %p222 = scmp.ne.s32.totalorder %s217, %s219
      %p223 = scmp.eq.s32.totalorder %s47, 0
      %p224 = por %p222, %p223
      %p225 = scmp.ne.s32.totalorder %s217, %s219
      %p226 = scmp.eq.s32.totalorder %s52, 1
      %p227 = por %p225, %p226
      %p228 = scmp.ne.s32.totalorder %s219, %s220
      %p229 = scmp.eq.s32.totalorder %s52, 0
      %p230 = por %p228, %p229
      %p231 = scmp.ne.s32.totalorder %s219, %s220
      %p232 = scmp.eq.s32.totalorder %s53, 1
      %p233 = por %p231, %p232
      %p235 = scmp.ne.s32.totalorder %s220, %s234
      %p236 = scmp.eq.s32.totalorder %s53, 0
      %p237 = por %p235, %p236
      %s239 = sadd.s32 %s238, 1
      %p242 = scmp.eq.s32.totalorder %s47, 1
      %p243 = scmp.ne.s32.totalorder %s238, %s240
      %p244 = scmp.eq.s32.totalorder %s47, 0
      %p245 = por %p243, %p244
      %p246 = scmp.ne.s32.totalorder %s238, %s240
      %p247 = scmp.eq.s32.totalorder %s52, 1
      %p248 = por %p246, %p247
      %p249 = scmp.ne.s32.totalorder %s240, %s241
      %p250 = scmp.eq.s32.totalorder %s52, 0
      %p251 = por %p249, %p250
      %p252 = scmp.ne.s32.totalorder %s240, %s241
      %p253 = scmp.eq.s32.totalorder %s53, 1
      %p254 = por %p252, %p253
      %p256 = scmp.ne.s32.totalorder %s241, %s255
      %p257 = scmp.eq.s32.totalorder %s53, 0
      %p258 = por %p256, %p257
      %s260 = sadd.s32 %s259, 1
      %p263 = scmp.eq.s32.totalorder %s47, 1
      %p264 = scmp.ne.s32.totalorder %s259, %s261
      %p265 = scmp.eq.s32.totalorder %s47, 0
      %p266 = por %p264, %p265
      %p267 = scmp.ne.s32.totalorder %s259, %s261
      %p268 = scmp.eq.s32.totalorder %s52, 1
      %p269 = por %p267, %p268
      %p270 = scmp.ne.s32.totalorder %s261, %s262
      %p271 = scmp.eq.s32.totalorder %s52, 0
      %p272 = por %p270, %p271
      %p273 = scmp.ne.s32.totalorder %s261, %s262
      %p274 = scmp.eq.s32.totalorder %s53, 1
      %p275 = por %p273, %p274
      %p277 = scmp.ne.s32.totalorder %s262, %s276
      %p278 = scmp.eq.s32.totalorder %s53, 0
      %p279 = por %p277, %p278
      %s281 = sadd.s32 %s280, 1
      %p284 = scmp.eq.s32.totalorder %s47, 1
      %p285 = scmp.ne.s32.totalorder %s280, %s282
      %p286 = scmp.eq.s32.totalorder %s47, 0
      %p287 = por %p285, %p286
      %p288 = scmp.ne.s32.totalorder %s280, %s282
      %p289 = scmp.eq.s32.totalorder %s52, 1
      %p290 = por %p288, %p289
      %p291 = scmp.ne.s32.totalorder %s282, %s283
      %p292 = scmp.eq.s32.totalorder %s52, 0
      %p293 = por %p291, %p292
      %p294 = scmp.ne.s32.totalorder %s282, %s283
      %p295 = scmp.eq.s32.totalorder %s53, 1
      %p296 = por %p294, %p295
      %p298 = scmp.ne.s32.totalorder %s283, %s297
      %p299 = scmp.eq.s32.totalorder %s53, 0
      %p300 = por %p298, %p299
      %s302 = sadd.s32 %s301, 1
      %p305 = scmp.eq.s32.totalorder %s47, 1
      %p306 = scmp.ne.s32.totalorder %s301, %s303
      %p307 = scmp.eq.s32.totalorder %s47, 0
      %p308 = por %p306, %p307
      %p309 = scmp.ne.s32.totalorder %s301, %s303
      %p310 = scmp.eq.s32.totalorder %s52, 1
      %p311 = por %p309, %p310
      %p312 = scmp.ne.s32.totalorder %s303, %s304
      %p313 = scmp.eq.s32.totalorder %s52, 0
      %p314 = por %p312, %p313
      %p315 = scmp.ne.s32.totalorder %s303, %s304
      %p316 = scmp.eq.s32.totalorder %s53, 1
      %p317 = por %p315, %p316
      %p319 = scmp.ne.s32.totalorder %s304, %s318
      %p320 = scmp.eq.s32.totalorder %s53, 0
      %p321 = por %p319, %p320
      %s323 = sadd.s32 %s322, 1
      %p326 = scmp.eq.s32.totalorder %s47, 1
      %p327 = scmp.ne.s32.totalorder %s322, %s324
      %p328 = scmp.eq.s32.totalorder %s47, 0
      %p329 = por %p327, %p328
      %p330 = scmp.ne.s32.totalorder %s322, %s324
      %p331 = scmp.eq.s32.totalorder %s52, 1
      %p332 = por %p330, %p331
      %p333 = scmp.ne.s32.totalorder %s324, %s325
      %p334 = scmp.eq.s32.totalorder %s52, 0
      %p335 = por %p333, %p334
      %p336 = scmp.ne.s32.totalorder %s324, %s325
      %p337 = scmp.eq.s32.totalorder %s53, 1
      %p338 = por %p336, %p337
      %p340 = scmp.ne.s32.totalorder %s325, %s339
      %p341 = scmp.eq.s32.totalorder %s53, 0
      %p342 = por %p340, %p341
      %s344 = sadd.s32 %s343, 1
      %p347 = scmp.eq.s32.totalorder %s47, 1
      %p348 = scmp.ne.s32.totalorder %s343, %s345
      %p349 = scmp.eq.s32.totalorder %s47, 0
      %p350 = por %p348, %p349
      %p351 = scmp.ne.s32.totalorder %s343, %s345
      %p352 = scmp.eq.s32.totalorder %s52, 1
      %p353 = por %p351, %p352
      %p354 = scmp.ne.s32.totalorder %s345, %s346
      %p355 = scmp.eq.s32.totalorder %s52, 0
      %p356 = por %p354, %p355
      %p357 = scmp.ne.s32.totalorder %s345, %s346
      %p358 = scmp.eq.s32.totalorder %s53, 1
      %p359 = por %p357, %p358
      %p361 = scmp.ne.s32.totalorder %s346, %s360
      %p362 = scmp.eq.s32.totalorder %s53, 0
      %p363 = por %p361, %p362
      %s365 = sadd.s32 %s364, 1
      %p368 = scmp.eq.s32.totalorder %s47, 1
      %p369 = scmp.ne.s32.totalorder %s364, %s366
      %p370 = scmp.eq.s32.totalorder %s47, 0
      %p371 = por %p369, %p370
      %p372 = scmp.ne.s32.totalorder %s364, %s366
      %p373 = scmp.eq.s32.totalorder %s52, 1
      %p374 = por %p372, %p373
      %p375 = scmp.ne.s32.totalorder %s366, %s367
      %p376 = scmp.eq.s32.totalorder %s52, 0
      %p377 = por %p375, %p376
      %p378 = scmp.ne.s32.totalorder %s366, %s367
      %p379 = scmp.eq.s32.totalorder %s53, 1
      %p380 = por %p378, %p379
      %p382 = scmp.ne.s32.totalorder %s367, %s381
      %p383 = scmp.eq.s32.totalorder %s53, 0
      %p384 = por %p382, %p383
      %s386 = sadd.s32 %s385, 1
      %p389 = scmp.eq.s32.totalorder %s47, 1
      %p390 = scmp.ne.s32.totalorder %s385, %s387
      %p391 = scmp.eq.s32.totalorder %s47, 0
      %p392 = por %p390, %p391
      %p393 = scmp.ne.s32.totalorder %s385, %s387
      %p394 = scmp.eq.s32.totalorder %s52, 1
      %p395 = por %p393, %p394
      %p396 = scmp.ne.s32.totalorder %s387, %s388
      %p397 = scmp.eq.s32.totalorder %s52, 0
      %p398 = por %p396, %p397
      %p399 = scmp.ne.s32.totalorder %s387, %s388
      %p400 = scmp.eq.s32.totalorder %s53, 1
      %p401 = por %p399, %p400
      %p403 = scmp.ne.s32.totalorder %s388, %s402
      %p404 = scmp.eq.s32.totalorder %s53, 0
      %p405 = por %p403, %p404
      %s407 = sadd.s32 %s406, 1
      %p410 = scmp.eq.s32.totalorder %s47, 1
      %p411 = scmp.ne.s32.totalorder %s406, %s408
      %p412 = scmp.eq.s32.totalorder %s47, 0
      %p413 = por %p411, %p412
      %p414 = scmp.ne.s32.totalorder %s406, %s408
      %p415 = scmp.eq.s32.totalorder %s52, 1
      %p416 = por %p414, %p415
      %p417 = scmp.ne.s32.totalorder %s408, %s409
      %p418 = scmp.eq.s32.totalorder %s52, 0
      %p419 = por %p417, %p418
      %p420 = scmp.ne.s32.totalorder %s408, %s409
      %p421 = scmp.eq.s32.totalorder %s53, 1
      %p422 = por %p420, %p421
      %p424 = scmp.ne.s32.totalorder %s409, %s423
      %p425 = scmp.eq.s32.totalorder %s53, 0
      %p426 = por %p424, %p425
      %s428 = sadd.s32 %s427, 1
      %p431 = scmp.eq.s32.totalorder %s47, 1
      %p432 = scmp.ne.s32.totalorder %s427, %s429
      %p433 = scmp.eq.s32.totalorder %s47, 0
      %p434 = por %p432, %p433
      %p435 = scmp.ne.s32.totalorder %s427, %s429
      %p436 = scmp.eq.s32.totalorder %s52, 1
      %p437 = por %p435, %p436
      %p438 = scmp.ne.s32.totalorder %s429, %s430
      %p439 = scmp.eq.s32.totalorder %s52, 0
      %p440 = por %p438, %p439
      %p441 = scmp.ne.s32.totalorder %s429, %s430
      %p442 = scmp.eq.s32.totalorder %s53, 1
      %p443 = por %p441, %p442
      %p445 = scmp.ne.s32.totalorder %s430, %s444
      %p446 = scmp.eq.s32.totalorder %s53, 0
      %p447 = por %p445, %p446
      %s449 = sadd.s32 %s448, 1
      %p452 = scmp.eq.s32.totalorder %s47, 1
      %p453 = scmp.ne.s32.totalorder %s448, %s450
      %p454 = scmp.eq.s32.totalorder %s47, 0
      %p455 = por %p453, %p454
      %p456 = scmp.ne.s32.totalorder %s448, %s450
      %p457 = scmp.eq.s32.totalorder %s52, 1
      %p458 = por %p456, %p457
      %p459 = scmp.ne.s32.totalorder %s450, %s451
      %p460 = scmp.eq.s32.totalorder %s52, 0
      %p461 = por %p459, %p460
      %p462 = scmp.ne.s32.totalorder %s450, %s451
      %p463 = scmp.eq.s32.totalorder %s53, 1
      %p464 = por %p462, %p463
      %p466 = scmp.ne.s32.totalorder %s451, %s465
      %p467 = scmp.eq.s32.totalorder %s53, 0
      %p468 = por %p466, %p467
      %s470 = sadd.s32 %s469, 1
      %p473 = scmp.eq.s32.totalorder %s47, 1
      %p474 = scmp.ne.s32.totalorder %s469, %s471
      %p475 = scmp.eq.s32.totalorder %s47, 0
      %p476 = por %p474, %p475
      %p477 = scmp.ne.s32.totalorder %s469, %s471
      %p478 = scmp.eq.s32.totalorder %s52, 1
      %p479 = por %p477, %p478
      %p480 = scmp.ne.s32.totalorder %s471, %s472
      %p481 = scmp.eq.s32.totalorder %s52, 0
      %p482 = por %p480, %p481
      %p483 = scmp.ne.s32.totalorder %s471, %s472
      %p484 = scmp.eq.s32.totalorder %s53, 1
      %p485 = por %p483, %p484
      %p487 = scmp.ne.s32.totalorder %s472, %s486
      %p488 = scmp.eq.s32.totalorder %s53, 0
      %p489 = por %p487, %p488
      %s491 = sadd.s32 %s490, 1
      %p494 = scmp.eq.s32.totalorder %s47, 1
      %p495 = scmp.ne.s32.totalorder %s490, %s492
      %p496 = scmp.eq.s32.totalorder %s47, 0
      %p497 = por %p495, %p496
      %p498 = scmp.ne.s32.totalorder %s490, %s492
      %p499 = scmp.eq.s32.totalorder %s52, 1
      %p500 = por %p498, %p499
      %p501 = scmp.ne.s32.totalorder %s492, %s493
      %p502 = scmp.eq.s32.totalorder %s52, 0
      %p503 = por %p501, %p502
      %p504 = scmp.ne.s32.totalorder %s492, %s493
      %p505 = scmp.eq.s32.totalorder %s53, 1
      %p506 = por %p504, %p505
      %p508 = scmp.ne.s32.totalorder %s493, %s507
      %p509 = scmp.eq.s32.totalorder %s53, 0
      %p510 = por %p508, %p509
      %s511 = ssub.s32 %s47, %s54
      %p512 = scmp.eq.s32.totalorder %s511, 0
      %s514 = sadd.s32 %s513, 1
      %s515 = scalar_select %p512, %s513, %s514
      %p518 = pneg %p512
      %p519 = scmp.eq.s32.totalorder %s47, 1
      %p520 = por %p518, %p519
      %p521 = scmp.ne.s32.totalorder %s513, %s516
      %p522 = scmp.eq.s32.totalorder %s47, 0
      %p523 = por %p521, %p522
      %p524 = scmp.ne.s32.totalorder %s513, %s516
      %p525 = scmp.eq.s32.totalorder %s52, 1
      %p526 = por %p524, %p525
      %p527 = scmp.ne.s32.totalorder %s516, %s517
      %p528 = scmp.eq.s32.totalorder %s52, 0
      %p529 = por %p527, %p528
      %p530 = scmp.ne.s32.totalorder %s516, %s517
      %p531 = scmp.eq.s32.totalorder %s53, 1
      %p532 = por %p530, %p531
      %p534 = scmp.ne.s32.totalorder %s517, %s533
      %p535 = scmp.eq.s32.totalorder %s53, 0
      %p536 = por %p534, %p535
      %s537 = ssub.s32 %s47, %s54
      %p538 = scmp.eq.s32.totalorder %s537, 0
      %s540 = sadd.s32 %s539, 1
      %s541 = scalar_select %p538, %s539, %s540
      %p544 = pneg %p538
      %p545 = scmp.eq.s32.totalorder %s47, 1
      %p546 = por %p544, %p545
      %p547 = scmp.ne.s32.totalorder %s539, %s542
      %p548 = scmp.eq.s32.totalorder %s47, 0
      %p549 = por %p547, %p548
      %p550 = scmp.ne.s32.totalorder %s539, %s542
      %p551 = scmp.eq.s32.totalorder %s52, 1
      %p552 = por %p550, %p551
      %p553 = scmp.ne.s32.totalorder %s542, %s543
      %p554 = scmp.eq.s32.totalorder %s52, 0
      %p555 = por %p553, %p554
      %p556 = scmp.ne.s32.totalorder %s542, %s543
      %p557 = scmp.eq.s32.totalorder %s53, 1
      %p558 = por %p556, %p557
      %p560 = scmp.ne.s32.totalorder %s543, %s559
      %p561 = scmp.eq.s32.totalorder %s53, 0
      %p562 = por %p560, %p561
      %s563 = ssub.s32 %s47, %s54
      %p564 = scmp.eq.s32.totalorder %s563, 0
      %s566 = sadd.s32 %s565, 1
      %s567 = scalar_select %p564, %s565, %s566
      %p570 = pneg %p564
      %p571 = scmp.eq.s32.totalorder %s47, 1
      %p572 = por %p570, %p571
      %p573 = scmp.ne.s32.totalorder %s565, %s568
      %p574 = scmp.eq.s32.totalorder %s47, 0
      %p575 = por %p573, %p574
      %p576 = scmp.ne.s32.totalorder %s565, %s568
      %p577 = scmp.eq.s32.totalorder %s52, 1
      %p578 = por %p576, %p577
      %p579 = scmp.ne.s32.totalorder %s568, %s569
      %p580 = scmp.eq.s32.totalorder %s52, 0
      %p581 = por %p579, %p580
      %p582 = scmp.ne.s32.totalorder %s568, %s569
      %p583 = scmp.eq.s32.totalorder %s53, 1
      %p584 = por %p582, %p583
      %p586 = scmp.ne.s32.totalorder %s569, %s585
      %p587 = scmp.eq.s32.totalorder %s53, 0
      %p588 = por %p586, %p587
      %p589 = scmp.le.s32.totalorder 1, %s47
      %p590 = scmp.lt.s32.totalorder %s47, 3
      %p591 = pnand %p589, %p590
      %p592 = pneg %p591
      // Predicated region
      $region9: #{tpu_custom_call.1} parent=5 // pred_check
        _
      $region10: #{tpu_custom_call.1} parent=5 // pred_check_branch
        %594 = sbr.rel (%p591) target = $region12
      $region11: #{tpu_custom_call.1} parent=5 // pred_region
        %s595 = ssub.s32 %s47, 1
        // Predicated region
        $region13: #{tpu_custom_call.1} parent=11 // pred_check
          %p596 = pneg %p146
        $region14: #{tpu_custom_call.1} parent=11 // pred_check_branch
          %598 = sbr.rel (%p596) target = $region16
        $region15: #{tpu_custom_call.1} parent=11 // pred_region
          %s600 = ssub.s32 1024, 1024
          %601 = vsyncadd [#allocation9], %s600
          %s602 = sshll.u32 [#allocation8], 4
          %s603 = int_to_ptr.vmem [resolvable:$true] %s602
          %608 = dma.hbm_to_vmem [thread:$0]  %s3, 1024, %s603, [#allocation9], 64, 64, 4
        $region16: #{tpu_custom_call.1} parent=11 // pred_fallthru
          _
        // Predicated region
        $region17: #{tpu_custom_call.1} parent=11 // pred_check
          %p609 = pneg %p167
        $region18: #{tpu_custom_call.1} parent=11 // pred_check_branch
          %611 = sbr.rel (%p609) target = $region20
        $region19: #{tpu_custom_call.1} parent=11 // pred_region
          _
        $region20: #{tpu_custom_call.1} parent=11 // pred_fallthru
          _
        // Predicated region
        $region21: #{tpu_custom_call.1} parent=11 // pred_check
          %p612 = pneg %p188
        $region22: #{tpu_custom_call.1} parent=11 // pred_check_branch
          %614 = sbr.rel (%p612) target = $region24
        $region23: #{tpu_custom_call.1} parent=11 // pred_region
          %s616 = ssub.s32 1024, 1024
          %617 = vsyncadd [#allocation9], %s616
          %s618 = sshll.u32 [#allocation10], 4
          %s619 = int_to_ptr.vmem [resolvable:$true] %s618
          %624 = dma.hbm_to_vmem [thread:$0]  %s5, 1024, %s619, [#allocation9], 64, 64, 4
        $region24: #{tpu_custom_call.1} parent=11 // pred_fallthru
          _
        // Predicated region
        $region25: #{tpu_custom_call.1} parent=11 // pred_check
          %p625 = pneg %p209
        $region26: #{tpu_custom_call.1} parent=11 // pred_check_branch
          %627 = sbr.rel (%p625) target = $region28
        $region27: #{tpu_custom_call.1} parent=11 // pred_region
          _
        $region28: #{tpu_custom_call.1} parent=11 // pred_fallthru
          _
        // Predicated region
        $region29: #{tpu_custom_call.1} parent=11 // pred_check
          %p628 = pneg %p230
        $region30: #{tpu_custom_call.1} parent=11 // pred_check_branch
          %630 = sbr.rel (%p628) target = $region32
        $region31: #{tpu_custom_call.1} parent=11 // pred_region
          %s632 = ssub.s32 1024, 1024
          %633 = vsyncadd [#allocation12], %s632
          %s634 = sshll.u32 [#allocation11], 4
          %s635 = int_to_ptr.vmem [resolvable:$true] %s634
          %640 = dma.hbm_to_vmem [thread:$0]  %s7, 1024, %s635, [#allocation12], 64, 64, 4
        $region32: #{tpu_custom_call.1} parent=11 // pred_fallthru
          _
        // Predicated region
        $region33: #{tpu_custom_call.1} parent=11 // pred_check
          %p641 = pneg %p251
        $region34: #{tpu_custom_call.1} parent=11 // pred_check_branch
          %643 = sbr.rel (%p641) target = $region36
        $region35: #{tpu_custom_call.1} parent=11 // pred_region
          %s645 = ssub.s32 1024, 1024
          %646 = vsyncadd [#allocation12], %s645
          %s647 = sshll.u32 [#allocation13], 4
          %s648 = int_to_ptr.vmem [resolvable:$true] %s647
          %653 = dma.hbm_to_vmem [thread:$0]  %s8, 1024, %s648, [#allocation12], 64, 64, 4
        $region36: #{tpu_custom_call.1} parent=11 // pred_fallthru
          _
        // Predicated region
        $region37: #{tpu_custom_call.1} parent=11 // pred_check
          %p654 = pneg %p272
        $region38: #{tpu_custom_call.1} parent=11 // pred_check_branch
          %656 = sbr.rel (%p654) target = $region40
        $region39: #{tpu_custom_call.1} parent=11 // pred_region
          _
        $region40: #{tpu_custom_call.1} parent=11 // pred_fallthru
          _
        // Predicated region
        $region41: #{tpu_custom_call.1} parent=11 // pred_check
          %p657 = pneg %p293
        $region42: #{tpu_custom_call.1} parent=11 // pred_check_branch
          %659 = sbr.rel (%p657) target = $region44
        $region43: #{tpu_custom_call.1} parent=11 // pred_region
          %s661 = ssub.s32 1024, 1024
          %662 = vsyncadd [#allocation15], %s661
          %s663 = sshll.u32 [#allocation14], 4
          %s664 = int_to_ptr.vmem [resolvable:$true] %s663
          %669 = dma.hbm_to_vmem [thread:$0]  %s10, 1024, %s664, [#allocation15], 64, 64, 4
        $region44: #{tpu_custom_call.1} parent=11 // pred_fallthru
          _
        // Predicated region
        $region45: #{tpu_custom_call.1} parent=11 // pred_check
          %p670 = pneg %p314
        $region46: #{tpu_custom_call.1} parent=11 // pred_check_branch
          %672 = sbr.rel (%p670) target = $region48
        $region47: #{tpu_custom_call.1} parent=11 // pred_region
          _
        $region48: #{tpu_custom_call.1} parent=11 // pred_fallthru
          _
        // Predicated region
        $region49: #{tpu_custom_call.1} parent=11 // pred_check
          %p673 = pneg %p335
        $region50: #{tpu_custom_call.1} parent=11 // pred_check_branch
          %675 = sbr.rel (%p673) target = $region52
        $region51: #{tpu_custom_call.1} parent=11 // pred_region
          %s677 = ssub.s32 1024, 1024
          %678 = vsyncadd [#allocation15], %s677
          %s679 = sshll.u32 [#allocation16], 4
          %s680 = int_to_ptr.vmem [resolvable:$true] %s679
          %685 = dma.hbm_to_vmem [thread:$0]  %s12, 1024, %s680, [#allocation15], 64, 64, 4
        $region52: #{tpu_custom_call.1} parent=11 // pred_fallthru
          _
        // Predicated region
        $region53: #{tpu_custom_call.1} parent=11 // pred_check
          %p686 = pneg %p356
        $region54: #{tpu_custom_call.1} parent=11 // pred_check_branch
          %688 = sbr.rel (%p686) target = $region56
        $region55: #{tpu_custom_call.1} parent=11 // pred_region
          _
        $region56: #{tpu_custom_call.1} parent=11 // pred_fallthru
          _
        // Predicated region
        $region57: #{tpu_custom_call.1} parent=11 // pred_check
          %p689 = pneg %p377
        $region58: #{tpu_custom_call.1} parent=11 // pred_check_branch
          %691 = sbr.rel (%p689) target = $region60
        $region59: #{tpu_custom_call.1} parent=11 // pred_region
          %s693 = ssub.s32 1024, 1024
          %694 = vsyncadd [#allocation18], %s693
          %s695 = sshll.u32 [#allocation17], 4
          %s696 = int_to_ptr.vmem [resolvable:$true] %s695
          %701 = dma.hbm_to_vmem [thread:$0]  %s14, 1024, %s696, [#allocation18], 64, 64, 4
        $region60: #{tpu_custom_call.1} parent=11 // pred_fallthru
          _
        // Predicated region
        $region61: #{tpu_custom_call.1} parent=11 // pred_check
          %p702 = pneg %p398
        $region62: #{tpu_custom_call.1} parent=11 // pred_check_branch
          %704 = sbr.rel (%p702) target = $region64
        $region63: #{tpu_custom_call.1} parent=11 // pred_region
          %s706 = ssub.s32 1024, 1024
          %707 = vsyncadd [#allocation18], %s706
          %s708 = sshll.u32 [#allocation19], 4
          %s709 = int_to_ptr.vmem [resolvable:$true] %s708
          %714 = dma.hbm_to_vmem [thread:$0]  %s15, 1024, %s709, [#allocation18], 64, 64, 4
        $region64: #{tpu_custom_call.1} parent=11 // pred_fallthru
          _
        // Predicated region
        $region65: #{tpu_custom_call.1} parent=11 // pred_check
          %p715 = pneg %p419
        $region66: #{tpu_custom_call.1} parent=11 // pred_check_branch
          %717 = sbr.rel (%p715) target = $region68
        $region67: #{tpu_custom_call.1} parent=11 // pred_region
          _
        $region68: #{tpu_custom_call.1} parent=11 // pred_fallthru
          _
        // Predicated region
        $region69: #{tpu_custom_call.1} parent=11 // pred_check
          %p718 = pneg %p440
        $region70: #{tpu_custom_call.1} parent=11 // pred_check_branch
          %720 = sbr.rel (%p718) target = $region72
        $region71: #{tpu_custom_call.1} parent=11 // pred_region
          %s722 = ssub.s32 1024, 1024
          %723 = vsyncadd [#allocation21], %s722
          %s724 = sshll.u32 [#allocation20], 4
          %s725 = int_to_ptr.vmem [resolvable:$true] %s724
          %730 = dma.hbm_to_vmem [thread:$0]  %s17, 1024, %s725, [#allocation21], 64, 64, 4
        $region72: #{tpu_custom_call.1} parent=11 // pred_fallthru
          _
        // Predicated region
        $region73: #{tpu_custom_call.1} parent=11 // pred_check
          %p731 = pneg %p461
        $region74: #{tpu_custom_call.1} parent=11 // pred_check_branch
          %733 = sbr.rel (%p731) target = $region76
        $region75: #{tpu_custom_call.1} parent=11 // pred_region
          _
        $region76: #{tpu_custom_call.1} parent=11 // pred_fallthru
          _
        // Predicated region
        $region77: #{tpu_custom_call.1} parent=11 // pred_check
          %p734 = pneg %p482
        $region78: #{tpu_custom_call.1} parent=11 // pred_check_branch
          %736 = sbr.rel (%p734) target = $region80
        $region79: #{tpu_custom_call.1} parent=11 // pred_region
          %s738 = ssub.s32 1024, 1024
          %739 = vsyncadd [#allocation21], %s738
          %s740 = sshll.u32 [#allocation22], 4
          %s741 = int_to_ptr.vmem [resolvable:$true] %s740
          %746 = dma.hbm_to_vmem [thread:$0]  %s19, 1024, %s741, [#allocation21], 64, 64, 4
        $region80: #{tpu_custom_call.1} parent=11 // pred_fallthru
          _
        // Predicated region
        $region81: #{tpu_custom_call.1} parent=11 // pred_check
          %p747 = pneg %p503
        $region82: #{tpu_custom_call.1} parent=11 // pred_check_branch
          %749 = sbr.rel (%p747) target = $region84
        $region83: #{tpu_custom_call.1} parent=11 // pred_region
          _
        $region84: #{tpu_custom_call.1} parent=11 // pred_fallthru
          _
      $region12: #{tpu_custom_call.1} parent=5 // pred_fallthru
        _
      %p750 = scmp.lt.s32.totalorder %s47, 2
      // Predicated region
      $region85: #{tpu_custom_call.1} parent=5 // pred_check
        %p751 = pneg %p750
      $region86: #{tpu_custom_call.1} parent=5 // pred_check_branch
        %753 = sbr.rel (%p751) target = $region88
      $region87: #{tpu_custom_call.1} parent=5 // pred_region
        // Predicated region
        $region89: #{tpu_custom_call.1} parent=87 // pred_check
          %p754 = pneg %p67
        $region90: #{tpu_custom_call.1} parent=87 // pred_check_branch
          %756 = sbr.rel (%p754) target = $region92
        $region91: #{tpu_custom_call.1} parent=87 // pred_region
          %s757 = sand.u32 %s57, 1
          %s758 = scalar_lea.sflag [#allocation3], %s757
          %s759 = sand.u32 %s57, 1
          %s760 = smul.addr %s759, 4
          %s761 = scalar_lea.vmem [#allocation2], %s760
          %s763 = ssub.s32 64, 64
          %764 = vsyncadd %s758, %s763
          %s765 = smul.addr %s47, 64
          %s766 = scalar_lea.hbm %s0, %s765
          %s768 = sshll.u32 %s761, 4
          %s769 = int_to_ptr.vmem [resolvable:$true] %s768
          %771 = dma.hbm_to_vmem [thread:$0]  %s766, 64, %s769, %s758
        $region92: #{tpu_custom_call.1} parent=87 // pred_fallthru
          _
        // Predicated region
        $region93: #{tpu_custom_call.1} parent=87 // pred_check
          %p772 = pneg %p93
        $region94: #{tpu_custom_call.1} parent=87 // pred_check_branch
          %774 = sbr.rel (%p772) target = $region96
        $region95: #{tpu_custom_call.1} parent=87 // pred_region
          %s775 = sand.u32 %s47, 1
          %s776 = scalar_lea.sflag [#allocation6], %s775
          %s777 = sand.u32 %s83, 1
          %s778 = smul.addr %s777, 4
          %s779 = scalar_lea.vmem [#allocation5], %s778
          %s781 = ssub.s32 64, 64
          %782 = vsyncadd %s776, %s781
          %s783 = smul.addr %s47, 64
          %s784 = scalar_lea.hbm %s1, %s783
          %s786 = sshll.u32 %s779, 4
          %s787 = int_to_ptr.vmem [resolvable:$true] %s786
          %789 = dma.hbm_to_vmem [thread:$0]  %s784, 64, %s787, %s776
        $region96: #{tpu_custom_call.1} parent=87 // pred_fallthru
          _
        // Predicated region
        $region97: #{tpu_custom_call.1} parent=87 // pred_check
          %p790 = pneg %p119
        $region98: #{tpu_custom_call.1} parent=87 // pred_check_branch
          %792 = sbr.rel (%p790) target = $region100
        $region99: #{tpu_custom_call.1} parent=87 // pred_region
          %s793 = sand.u32 %s47, 1
          %s794 = scalar_lea.sflag [#allocation6], %s793
          %s795 = sand.u32 %s109, 1
          %s796 = smul.addr %s795, 4
          %s797 = scalar_lea.vmem [#allocation7], %s796
          %s799 = ssub.s32 64, 64
          %800 = vsyncadd %s794, %s799
          %s801 = smul.addr %s47, 64
          %s802 = scalar_lea.hbm %s2, %s801
          %s804 = sshll.u32 %s797, 4
          %s805 = int_to_ptr.vmem [resolvable:$true] %s804
          %807 = dma.hbm_to_vmem [thread:$0]  %s802, 64, %s805, %s794
        $region100: #{tpu_custom_call.1} parent=87 // pred_fallthru
          _
      $region88: #{tpu_custom_call.1} parent=5 // pred_fallthru
        _
      %p808 = scmp.le.s32.totalorder 1, %s47
      %p809 = scmp.lt.s32.totalorder %s47, 3
      %p810 = pnand %p808, %p809
      %p811 = pneg %p810
      // Predicated region
      $region101: #{tpu_custom_call.1} parent=5 // pred_check
        _
      $region102: #{tpu_custom_call.1} parent=5 // pred_check_branch
        %813 = sbr.rel (%p810) target = $region104
      $region103: #{tpu_custom_call.1} parent=5 // pred_region
        %s814 = ssub.s32 %s47, 1
        %s815 = sand.u32 %s60, 1
        %s816 = scalar_lea.sflag [#allocation3], %s815
        %s817 = sand.u32 %s60, 1
        %s818 = smul.addr %s817, 4
        %s819 = scalar_lea.vmem [#allocation2], %s818
        // Predicated region
        $region105: #{tpu_custom_call.1} parent=103 // pred_check
          %p820 = pneg %p73
        $region106: #{tpu_custom_call.1} parent=103 // pred_check_branch
          %822 = sbr.rel (%p820) target = $region108
        $region107: #{tpu_custom_call.1} parent=103 // pred_region
          %823 = dma.done %s816, 64
        $region108: #{tpu_custom_call.1} parent=103 // pred_fallthru
          _
        %s824 = sand.u32 %s52, 1
        %s825 = scalar_lea.sflag [#allocation6], %s824
        %s826 = sand.u32 %s86, 1
        %s827 = smul.addr %s826, 4
        %s828 = scalar_lea.vmem [#allocation5], %s827
        // Predicated region
        $region109: #{tpu_custom_call.1} parent=103 // pred_check
          %p829 = pneg %p99
        $region110: #{tpu_custom_call.1} parent=103 // pred_check_branch
          %831 = sbr.rel (%p829) target = $region112
        $region111: #{tpu_custom_call.1} parent=103 // pred_region
          %832 = dma.done %s825, 64
        $region112: #{tpu_custom_call.1} parent=103 // pred_fallthru
          _
        %s833 = sand.u32 %s52, 1
        %s834 = scalar_lea.sflag [#allocation6], %s833
        %s835 = sand.u32 %s112, 1
        %s836 = smul.addr %s835, 4
        %s837 = scalar_lea.vmem [#allocation7], %s836
        // Predicated region
        $region113: #{tpu_custom_call.1} parent=103 // pred_check
          %p838 = pneg %p125
        $region114: #{tpu_custom_call.1} parent=103 // pred_check_branch
          %840 = sbr.rel (%p838) target = $region116
        $region115: #{tpu_custom_call.1} parent=103 // pred_region
          %841 = dma.done %s834, 64
        $region116: #{tpu_custom_call.1} parent=103 // pred_fallthru
          _
        // Predicated region
        $region117: #{tpu_custom_call.1} parent=103 // pred_check
          %p842 = pneg %p146
        $region118: #{tpu_custom_call.1} parent=103 // pred_check_branch
          %844 = sbr.rel (%p842) target = $region120
        $region119: #{tpu_custom_call.1} parent=103 // pred_region
          %845 = dma.done [#allocation9], 1024
        $region120: #{tpu_custom_call.1} parent=103 // pred_fallthru
          _
        // Predicated region
        $region121: #{tpu_custom_call.1} parent=103 // pred_check
          %p846 = pneg %p188
        $region122: #{tpu_custom_call.1} parent=103 // pred_check_branch
          %848 = sbr.rel (%p846) target = $region124
        $region123: #{tpu_custom_call.1} parent=103 // pred_region
          %849 = dma.done [#allocation9], 1024
        $region124: #{tpu_custom_call.1} parent=103 // pred_fallthru
          _
        // Predicated region
        $region125: #{tpu_custom_call.1} parent=103 // pred_check
          %p850 = pneg %p230
        $region126: #{tpu_custom_call.1} parent=103 // pred_check_branch
          %852 = sbr.rel (%p850) target = $region128
        $region127: #{tpu_custom_call.1} parent=103 // pred_region
          %853 = dma.done [#allocation12], 1024
        $region128: #{tpu_custom_call.1} parent=103 // pred_fallthru
          _
        // Predicated region
        $region129: #{tpu_custom_call.1} parent=103 // pred_check
          %p854 = pneg %p251
        $region130: #{tpu_custom_call.1} parent=103 // pred_check_branch
          %856 = sbr.rel (%p854) target = $region132
        $region131: #{tpu_custom_call.1} parent=103 // pred_region
          %857 = dma.done [#allocation12], 1024
        $region132: #{tpu_custom_call.1} parent=103 // pred_fallthru
          _
        // Predicated region
        $region133: #{tpu_custom_call.1} parent=103 // pred_check
          %p858 = pneg %p293
        $region134: #{tpu_custom_call.1} parent=103 // pred_check_branch
          %860 = sbr.rel (%p858) target = $region136
        $region135: #{tpu_custom_call.1} parent=103 // pred_region
          %861 = dma.done [#allocation15], 1024
        $region136: #{tpu_custom_call.1} parent=103 // pred_fallthru
          _
        // Predicated region
        $region137: #{tpu_custom_call.1} parent=103 // pred_check
          %p862 = pneg %p335
        $region138: #{tpu_custom_call.1} parent=103 // pred_check_branch
          %864 = sbr.rel (%p862) target = $region140
        $region139: #{tpu_custom_call.1} parent=103 // pred_region
          %865 = dma.done [#allocation15], 1024
        $region140: #{tpu_custom_call.1} parent=103 // pred_fallthru
          _
        // Predicated region
        $region141: #{tpu_custom_call.1} parent=103 // pred_check
          %p866 = pneg %p377
        $region142: #{tpu_custom_call.1} parent=103 // pred_check_branch
          %868 = sbr.rel (%p866) target = $region144
        $region143: #{tpu_custom_call.1} parent=103 // pred_region
          %869 = dma.done [#allocation18], 1024
        $region144: #{tpu_custom_call.1} parent=103 // pred_fallthru
          _
        // Predicated region
        $region145: #{tpu_custom_call.1} parent=103 // pred_check
          %p870 = pneg %p398
        $region146: #{tpu_custom_call.1} parent=103 // pred_check_branch
          %872 = sbr.rel (%p870) target = $region148
        $region147: #{tpu_custom_call.1} parent=103 // pred_region
          %873 = dma.done [#allocation18], 1024
        $region148: #{tpu_custom_call.1} parent=103 // pred_fallthru
          _
        // Predicated region
        $region149: #{tpu_custom_call.1} parent=103 // pred_check
          %p874 = pneg %p440
        $region150: #{tpu_custom_call.1} parent=103 // pred_check_branch
          %876 = sbr.rel (%p874) target = $region152
        $region151: #{tpu_custom_call.1} parent=103 // pred_region
          %877 = dma.done [#allocation21], 1024
        $region152: #{tpu_custom_call.1} parent=103 // pred_fallthru
          _
        // Predicated region
        $region153: #{tpu_custom_call.1} parent=103 // pred_check
          %p878 = pneg %p482
        $region154: #{tpu_custom_call.1} parent=103 // pred_check_branch
          %880 = sbr.rel (%p878) target = $region156
        $region155: #{tpu_custom_call.1} parent=103 // pred_region
          %881 = dma.done [#allocation21], 1024
        $region156: #{tpu_custom_call.1} parent=103 // pred_fallthru
          _
        %s882 = sand.u32 %s60, 1
        %s883 = scalar_lea.sflag [#allocation3], %s882
        %s884 = sand.u32 %s60, 1
        %s885 = smul.addr %s884, 4
        %s886 = scalar_lea.vmem [#allocation2], %s885
        %p887 = pneg %p73
        %p888 = pneg %p70
        %s889 = sand.u32 %s52, 1
        %s890 = scalar_lea.sflag [#allocation6], %s889
        %s891 = sand.u32 %s86, 1
        %s892 = smul.addr %s891, 4
        %s893 = scalar_lea.vmem [#allocation5], %s892
        %p894 = pneg %p99
        %p895 = pneg %p96
        %s896 = sand.u32 %s52, 1
        %s897 = scalar_lea.sflag [#allocation6], %s896
        %s898 = sand.u32 %s112, 1
        %s899 = smul.addr %s898, 4
        %s900 = scalar_lea.vmem [#allocation7], %s899
        %p901 = pneg %p125
        %p902 = pneg %p122
        %p903 = pneg %p146
        %p904 = pneg %p143
        %p905 = pneg %p167
        %p906 = pneg %p164
        %p907 = pneg %p188
        %p908 = pneg %p185
        %p909 = pneg %p209
        %p910 = pneg %p206
        %p911 = pneg %p230
        %p912 = pneg %p227
        %p913 = pneg %p251
        %p914 = pneg %p248
        %p915 = pneg %p272
        %p916 = pneg %p269
        %p917 = pneg %p293
        %p918 = pneg %p290
        %p919 = pneg %p314
        %p920 = pneg %p311
        %p921 = pneg %p335
        %p922 = pneg %p332
        %p923 = pneg %p356
        %p924 = pneg %p353
        %p925 = pneg %p377
        %p926 = pneg %p374
        %p927 = pneg %p398
        %p928 = pneg %p395
        %p929 = pneg %p419
        %p930 = pneg %p416
        %p931 = pneg %p440
        %p932 = pneg %p437
        %p933 = pneg %p461
        %p934 = pneg %p458
        %p935 = pneg %p482
        %p936 = pneg %p479
        %p937 = pneg %p503
        %p938 = pneg %p500
        %p939 = pneg %p529
        %p940 = pneg %p526
        %s941 = sand.u32 %s516, 1
        %s942 = scalar_lea.sflag [#allocation4], %s941
        %s943 = sand.u32 %s516, 1
        %s944 = smul.addr %s943, 8
        %s945 = scalar_lea.vmem [#allocation23], %s944
        %p946 = pneg %p555
        %p947 = pneg %p552
        %s948 = sand.u32 %s52, 1
        %s949 = scalar_lea.sflag [#allocation25], %s948
        %s950 = sand.u32 %s542, 1
        %s951 = smul.addr %s950, 8
        %s952 = scalar_lea.vmem [#allocation24], %s951
        %p953 = pneg %p581
        %p954 = pneg %p578
        %s955 = sand.u32 %s52, 1
        %s956 = scalar_lea.sflag [#allocation25], %s955
        %s957 = sand.u32 %s568, 1
        %s958 = smul.addr %s957, 8
        %s959 = scalar_lea.vmem [#allocation26], %s958
        %v961 = vld [vmem:[%s819] sm:$0xf]
        %v962 = vld [vmem:[#allocation8] sm:$0xf]
        %v963 = vld [vmem:[#allocation8 + $0x4] sm:$0xf]
        %v964 = vld [vmem:[#allocation8 + $0x8] sm:$0xf]
        %v965 = vld [vmem:[#allocation8 + $0xc] sm:$0xf]
        %v966 = vld [vmem:[#allocation8 + $0x10] sm:$0xf]
        %v967 = vld [vmem:[#allocation8 + $0x14] sm:$0xf]
        %v968 = vld [vmem:[#allocation8 + $0x18] sm:$0xf]
        %v969 = vld [vmem:[#allocation8 + $0x1c] sm:$0xf]
        %v970 = vld [vmem:[#allocation8 + $0x20] sm:$0xf]
        %v971 = vld [vmem:[#allocation8 + $0x24] sm:$0xf]
        %v972 = vld [vmem:[#allocation8 + $0x28] sm:$0xf]
        %v973 = vld [vmem:[#allocation8 + $0x2c] sm:$0xf]
        %v974 = vld [vmem:[#allocation8 + $0x30] sm:$0xf]
        %v975 = vld [vmem:[#allocation8 + $0x34] sm:$0xf]
        %v976 = vld [vmem:[#allocation8 + $0x38] sm:$0xf]
        %v977 = vld [vmem:[#allocation8 + $0x3c] sm:$0xf]
        %v978 = vld [vmem:[%s4] sm:$0x1]
        %v980 = vlaneseq
        %v981 = vshrl.u32 %v980, 7
        %v982 = vsub.s32 0, %v981
        %v983 = vrot.slane %v978, %v982
        %v1001 = vunpack.c.l.b16 %v962
        %v1002 = vunpack.c.l.b16 %v963
        %v1003 = vunpack.c.l.b16 %v964
        %v1004 = vunpack.c.l.b16 %v965
        %v1005 = vunpack.c.l.b16 %v966
        %v1006 = vunpack.c.l.b16 %v967
        %v1007 = vunpack.c.l.b16 %v968
        %v1008 = vunpack.c.l.b16 %v969
        %v1009 = vunpack.c.l.b16 %v970
        %v1010 = vunpack.c.l.b16 %v971
        %v1011 = vunpack.c.l.b16 %v972
        %v1012 = vunpack.c.l.b16 %v973
        %v1013 = vunpack.c.l.b16 %v974
        %v1014 = vunpack.c.l.b16 %v975
        %v1015 = vunpack.c.l.b16 %v976
        %v1016 = vunpack.c.l.b16 %v977
        %v1017 = vpack.c.b16 %v1002, %v1001
        %v1018 = vpack.c.b16 %v1004, %v1003
        %v1019 = vpack.c.b16 %v1006, %v1005
        %v1020 = vpack.c.b16 %v1008, %v1007
        %v1021 = vpack.c.b16 %v1010, %v1009
        %v1022 = vpack.c.b16 %v1012, %v1011
        %v1023 = vpack.c.b16 %v1014, %v1013
        %v1024 = vpack.c.b16 %v1016, %v1015
        %1033 = vmatprep.subr.bf16.mxu0 0
        %1034 = vmatpush1.bf16.msra.mxu0 %v1024
        %1035 = vmatprep.subr.bf16.mxu0 0
        %1036 = vmatpush1.bf16.msra.mxu0 %v1023
        %1037 = vmatprep.subr.bf16.mxu0 0
        %1038 = vmatpush1.bf16.msra.mxu0 %v1022
        %1039 = vmatprep.subr.bf16.mxu0 0
        %1040 = vmatpush1.bf16.msra.mxu0 %v1021
        %1041 = vmatprep.subr.bf16.mxu0 0
        %1042 = vmatpush1.bf16.msra.mxu0 %v1020
        %1043 = vmatprep.subr.bf16.mxu0 0
        %1044 = vmatpush1.bf16.msra.mxu0 %v1019
        %1045 = vmatprep.subr.bf16.mxu0 0
        %1046 = vmatpush1.bf16.msra.mxu0 %v1018
        %1047 = vmatprep.subr.bf16.mxu0 0
        %1048 = vmatpush1.bf16.msra.mxu0 %v1017
        %1049 = vmatprep.subr.bf16.mxu0 0
        %1050 = vmatpush2.bf16.msra.mxu0 0
        %1051 = vmatprep.subr.bf16.mxu0 0
        %1052 = vmatpush2.bf16.msra.mxu0 0
        %1053 = vmatprep.subr.bf16.mxu0 0
        %1054 = vmatpush2.bf16.msra.mxu0 0
        %1055 = vmatprep.subr.bf16.mxu0 0
        %1056 = vmatpush2.bf16.msra.mxu0 0
        %1057 = vmatprep.subr.bf16.mxu0 0
        %1058 = vmatpush2.bf16.msra.mxu0 0
        %1059 = vmatprep.subr.bf16.mxu0 0
        %1060 = vmatpush2.bf16.msra.mxu0 0
        %1061 = vmatprep.subr.bf16.mxu0 0
        %1062 = vmatpush2.bf16.msra.mxu0 0
        %1063 = vmatprep.subr.bf16.mxu0 0
        %1064 = vmatpush2.bf16.msra.mxu0 0
        %1065 = vmatprep.mubr.bf16.mxu0 0
        %1066 = vmatmul.mubr.bf16.gmra.mxu0 %v961
        %v1067 = vpop.f32.mrf.mxu0
        %v1068 = vadd.f32 %v983, %v1067
        %v1069 = vpop.f32.mrf.mxu0
        %v1070 = vpop.f32.mrf.mxu0
        %v1071 = vpop.f32.mrf.mxu0
        %1072 = vdwg.mxu0
        %v1073 = vmax.f32 %v1068, 0.0
        %v1074 = vpack.c.bf16 %v1073, %v1073
        %v1075 = vld [vmem:[#allocation10] sm:$0xf]
        %v1076 = vld [vmem:[#allocation10 + $0x4] sm:$0xf]
        %v1077 = vld [vmem:[#allocation10 + $0x8] sm:$0xf]
        %v1078 = vld [vmem:[#allocation10 + $0xc] sm:$0xf]
        %v1079 = vld [vmem:[#allocation10 + $0x10] sm:$0xf]
        %v1080 = vld [vmem:[#allocation10 + $0x14] sm:$0xf]
        %v1081 = vld [vmem:[#allocation10 + $0x18] sm:$0xf]
        %v1082 = vld [vmem:[#allocation10 + $0x1c] sm:$0xf]
        %v1083 = vld [vmem:[#allocation10 + $0x20] sm:$0xf]
        %v1084 = vld [vmem:[#allocation10 + $0x24] sm:$0xf]
        %v1085 = vld [vmem:[#allocation10 + $0x28] sm:$0xf]
        %v1086 = vld [vmem:[#allocation10 + $0x2c] sm:$0xf]
        %v1087 = vld [vmem:[#allocation10 + $0x30] sm:$0xf]
        %v1088 = vld [vmem:[#allocation10 + $0x34] sm:$0xf]
        %v1089 = vld [vmem:[#allocation10 + $0x38] sm:$0xf]
        %v1090 = vld [vmem:[#allocation10 + $0x3c] sm:$0xf]
        %v1091 = vld [vmem:[%s6] sm:$0x1]
        %v1093 = vlaneseq
        %v1094 = vshrl.u32 %v1093, 7
        %v1095 = vsub.s32 0, %v1094
        %v1096 = vrot.slane %v1091, %v1095
        %v1114 = vunpack.c.l.b16 %v1075
        %v1115 = vunpack.c.l.b16 %v1076
        %v1116 = vunpack.c.l.b16 %v1077
        %v1117 = vunpack.c.l.b16 %v1078
        %v1118 = vunpack.c.l.b16 %v1079
        %v1119 = vunpack.c.l.b16 %v1080
        %v1120 = vunpack.c.l.b16 %v1081
        %v1121 = vunpack.c.l.b16 %v1082
        %v1122 = vunpack.c.l.b16 %v1083
        %v1123 = vunpack.c.l.b16 %v1084
        %v1124 = vunpack.c.l.b16 %v1085
        %v1125 = vunpack.c.l.b16 %v1086
        %v1126 = vunpack.c.l.b16 %v1087
        %v1127 = vunpack.c.l.b16 %v1088
        %v1128 = vunpack.c.l.b16 %v1089
        %v1129 = vunpack.c.l.b16 %v1090
        %v1130 = vpack.c.b16 %v1115, %v1114
        %v1131 = vpack.c.b16 %v1117, %v1116
        %v1132 = vpack.c.b16 %v1119, %v1118
        %v1133 = vpack.c.b16 %v1121, %v1120
        %v1134 = vpack.c.b16 %v1123, %v1122
        %v1135 = vpack.c.b16 %v1125, %v1124
        %v1136 = vpack.c.b16 %v1127, %v1126
        %v1137 = vpack.c.b16 %v1129, %v1128
        %1146 = vmatprep.subr.bf16.mxu0 0
        %1147 = vmatpush1.bf16.msra.mxu0 %v1137
        %1148 = vmatprep.subr.bf16.mxu0 0
        %1149 = vmatpush1.bf16.msra.mxu0 %v1136
        %1150 = vmatprep.subr.bf16.mxu0 0
        %1151 = vmatpush1.bf16.msra.mxu0 %v1135
        %1152 = vmatprep.subr.bf16.mxu0 0
        %1153 = vmatpush1.bf16.msra.mxu0 %v1134
        %1154 = vmatprep.subr.bf16.mxu0 0
        %1155 = vmatpush1.bf16.msra.mxu0 %v1133
        %1156 = vmatprep.subr.bf16.mxu0 0
        %1157 = vmatpush1.bf16.msra.mxu0 %v1132
        %1158 = vmatprep.subr.bf16.mxu0 0
        %1159 = vmatpush1.bf16.msra.mxu0 %v1131
        %1160 = vmatprep.subr.bf16.mxu0 0
        %1161 = vmatpush1.bf16.msra.mxu0 %v1130
        %1162 = vmatprep.subr.bf16.mxu0 0
        %1163 = vmatpush2.bf16.msra.mxu0 0
        %1164 = vmatprep.subr.bf16.mxu0 0
        %1165 = vmatpush2.bf16.msra.mxu0 0
        %1166 = vmatprep.subr.bf16.mxu0 0
        %1167 = vmatpush2.bf16.msra.mxu0 0
        %1168 = vmatprep.subr.bf16.mxu0 0
        %1169 = vmatpush2.bf16.msra.mxu0 0
        %1170 = vmatprep.subr.bf16.mxu0 0
        %1171 = vmatpush2.bf16.msra.mxu0 0
        %1172 = vmatprep.subr.bf16.mxu0 0
        %1173 = vmatpush2.bf16.msra.mxu0 0
        %1174 = vmatprep.subr.bf16.mxu0 0
        %1175 = vmatpush2.bf16.msra.mxu0 0
        %1176 = vmatprep.subr.bf16.mxu0 0
        %1177 = vmatpush2.bf16.msra.mxu0 0
        %1178 = vmatprep.mubr.bf16.mxu0 0
        %1179 = vmatmul.mubr.bf16.gmra.mxu0 %v1074
        %v1180 = vpop.f32.mrf.mxu0
        %v1181 = vadd.f32 %v1096, %v1180
        %v1182 = vpop.f32.mrf.mxu0
        %v1183 = vpop.f32.mrf.mxu0
        %v1184 = vpop.f32.mrf.mxu0
        %1185 = vdwg.mxu0
        %v1186 = vld [vmem:[%s828] sm:$0xf]
        %1187 = vmatprep.subr.bf16.mxu0 0
        %1188 = vmatpush1.bf16.msra.mxu0 %v1024
        %1189 = vmatprep.subr.bf16.mxu0 0
        %1190 = vmatpush1.bf16.msra.mxu0 %v1023
        %1191 = vmatprep.subr.bf16.mxu0 0
        %1192 = vmatpush1.bf16.msra.mxu0 %v1022
        %1193 = vmatprep.subr.bf16.mxu0 0
        %1194 = vmatpush1.bf16.msra.mxu0 %v1021
        %1195 = vmatprep.subr.bf16.mxu0 0
        %1196 = vmatpush1.bf16.msra.mxu0 %v1020
        %1197 = vmatprep.subr.bf16.mxu0 0
        %1198 = vmatpush1.bf16.msra.mxu0 %v1019
        %1199 = vmatprep.subr.bf16.mxu0 0
        %1200 = vmatpush1.bf16.msra.mxu0 %v1018
        %1201 = vmatprep.subr.bf16.mxu0 0
        %1202 = vmatpush1.bf16.msra.mxu0 %v1017
        %1203 = vmatprep.subr.bf16.mxu0 0
        %1204 = vmatpush2.bf16.msra.mxu0 0
        %1205 = vmatprep.subr.bf16.mxu0 0
        %1206 = vmatpush2.bf16.msra.mxu0 0
        %1207 = vmatprep.subr.bf16.mxu0 0
        %1208 = vmatpush2.bf16.msra.mxu0 0
        %1209 = vmatprep.subr.bf16.mxu0 0
        %1210 = vmatpush2.bf16.msra.mxu0 0
        %1211 = vmatprep.subr.bf16.mxu0 0
        %1212 = vmatpush2.bf16.msra.mxu0 0
        %1213 = vmatprep.subr.bf16.mxu0 0
        %1214 = vmatpush2.bf16.msra.mxu0 0
        %1215 = vmatprep.subr.bf16.mxu0 0
        %1216 = vmatpush2.bf16.msra.mxu0 0
        %1217 = vmatprep.subr.bf16.mxu0 0
        %1218 = vmatpush2.bf16.msra.mxu0 0
        %1219 = vmatprep.mubr.bf16.mxu0 0
        %1220 = vmatmul.mubr.bf16.gmra.mxu0 %v1186
        %v1221 = vpop.f32.mrf.mxu0
        %v1222 = vadd.f32 %v983, %v1221
        %v1223 = vpop.f32.mrf.mxu0
        %v1224 = vpop.f32.mrf.mxu0
        %v1225 = vpop.f32.mrf.mxu0
        %1226 = vdwg.mxu0
        %v1227 = vmax.f32 %v1222, 0.0
        %v1228 = vpack.c.bf16 %v1227, %v1227
        %1229 = vmatprep.subr.bf16.mxu0 0
        %1230 = vmatpush1.bf16.msra.mxu0 %v1137
        %1231 = vmatprep.subr.bf16.mxu0 0
        %1232 = vmatpush1.bf16.msra.mxu0 %v1136
        %1233 = vmatprep.subr.bf16.mxu0 0
        %1234 = vmatpush1.bf16.msra.mxu0 %v1135
        %1235 = vmatprep.subr.bf16.mxu0 0
        %1236 = vmatpush1.bf16.msra.mxu0 %v1134
        %1237 = vmatprep.subr.bf16.mxu0 0
        %1238 = vmatpush1.bf16.msra.mxu0 %v1133
        %1239 = vmatprep.subr.bf16.mxu0 0
        %1240 = vmatpush1.bf16.msra.mxu0 %v1132
        %1241 = vmatprep.subr.bf16.mxu0 0
        %1242 = vmatpush1.bf16.msra.mxu0 %v1131
        %1243 = vmatprep.subr.bf16.mxu0 0
        %1244 = vmatpush1.bf16.msra.mxu0 %v1130
        %1245 = vmatprep.subr.bf16.mxu0 0
        %1246 = vmatpush2.bf16.msra.mxu0 0
        %1247 = vmatprep.subr.bf16.mxu0 0
        %1248 = vmatpush2.bf16.msra.mxu0 0
        %1249 = vmatprep.subr.bf16.mxu0 0
        %1250 = vmatpush2.bf16.msra.mxu0 0
        %1251 = vmatprep.subr.bf16.mxu0 0
        %1252 = vmatpush2.bf16.msra.mxu0 0
        %1253 = vmatprep.subr.bf16.mxu0 0
        %1254 = vmatpush2.bf16.msra.mxu0 0
        %1255 = vmatprep.subr.bf16.mxu0 0
        %1256 = vmatpush2.bf16.msra.mxu0 0
        %1257 = vmatprep.subr.bf16.mxu0 0
        %1258 = vmatpush2.bf16.msra.mxu0 0
        %1259 = vmatprep.subr.bf16.mxu0 0
        %1260 = vmatpush2.bf16.msra.mxu0 0
        %1261 = vmatprep.mubr.bf16.mxu0 0
        %1262 = vmatmul.mubr.bf16.gmra.mxu0 %v1228
        %v1263 = vpop.f32.mrf.mxu0
        %v1264 = vadd.f32 %v1096, %v1263
        %v1265 = vpop.f32.mrf.mxu0
        %v1266 = vpop.f32.mrf.mxu0
        %v1267 = vpop.f32.mrf.mxu0
        %1268 = vdwg.mxu0
        %1269 = vst [vmem:[%s952] sm:$0xff] %v1264
        %v1270 = vpack.c.bf16 %v1181, %v1181
        %v1271 = vpack.c.bf16 %v1264, %v1264
        %v1272 = vld [vmem:[#allocation11] sm:$0xf]
        %v1273 = vld [vmem:[#allocation11 + $0x4] sm:$0xf]
        %v1274 = vld [vmem:[#allocation11 + $0x8] sm:$0xf]
        %v1275 = vld [vmem:[#allocation11 + $0xc] sm:$0xf]
        %v1276 = vld [vmem:[#allocation11 + $0x10] sm:$0xf]
        %v1277 = vld [vmem:[#allocation11 + $0x14] sm:$0xf]
        %v1278 = vld [vmem:[#allocation11 + $0x18] sm:$0xf]
        %v1279 = vld [vmem:[#allocation11 + $0x1c] sm:$0xf]
        %v1280 = vld [vmem:[#allocation11 + $0x20] sm:$0xf]
        %v1281 = vld [vmem:[#allocation11 + $0x24] sm:$0xf]
        %v1282 = vld [vmem:[#allocation11 + $0x28] sm:$0xf]
        %v1283 = vld [vmem:[#allocation11 + $0x2c] sm:$0xf]
        %v1284 = vld [vmem:[#allocation11 + $0x30] sm:$0xf]
        %v1285 = vld [vmem:[#allocation11 + $0x34] sm:$0xf]
        %v1286 = vld [vmem:[#allocation11 + $0x38] sm:$0xf]
        %v1287 = vld [vmem:[#allocation11 + $0x3c] sm:$0xf]
        %v1288 = vld [vmem:[#allocation13] sm:$0xf]
        %v1289 = vld [vmem:[#allocation13 + $0x4] sm:$0xf]
        %v1290 = vld [vmem:[#allocation13 + $0x8] sm:$0xf]
        %v1291 = vld [vmem:[#allocation13 + $0xc] sm:$0xf]
        %v1292 = vld [vmem:[#allocation13 + $0x10] sm:$0xf]
        %v1293 = vld [vmem:[#allocation13 + $0x14] sm:$0xf]
        %v1294 = vld [vmem:[#allocation13 + $0x18] sm:$0xf]
        %v1295 = vld [vmem:[#allocation13 + $0x1c] sm:$0xf]
        %v1296 = vld [vmem:[#allocation13 + $0x20] sm:$0xf]
        %v1297 = vld [vmem:[#allocation13 + $0x24] sm:$0xf]
        %v1298 = vld [vmem:[#allocation13 + $0x28] sm:$0xf]
        %v1299 = vld [vmem:[#allocation13 + $0x2c] sm:$0xf]
        %v1300 = vld [vmem:[#allocation13 + $0x30] sm:$0xf]
        %v1301 = vld [vmem:[#allocation13 + $0x34] sm:$0xf]
        %v1302 = vld [vmem:[#allocation13 + $0x38] sm:$0xf]
        %v1303 = vld [vmem:[#allocation13 + $0x3c] sm:$0xf]
        %v1320 = vunpack.c.l.b16 %v1288
        %v1321 = vunpack.c.l.b16 %v1289
        %v1322 = vunpack.c.l.b16 %v1290
        %v1323 = vunpack.c.l.b16 %v1291
        %v1324 = vunpack.c.l.b16 %v1292
        %v1325 = vunpack.c.l.b16 %v1293
        %v1326 = vunpack.c.l.b16 %v1294
        %v1327 = vunpack.c.l.b16 %v1295
        %v1328 = vunpack.c.l.b16 %v1296
        %v1329 = vunpack.c.l.b16 %v1297
        %v1330 = vunpack.c.l.b16 %v1298
        %v1331 = vunpack.c.l.b16 %v1299
        %v1332 = vunpack.c.l.b16 %v1300
        %v1333 = vunpack.c.l.b16 %v1301
        %v1334 = vunpack.c.l.b16 %v1302
        %v1335 = vunpack.c.l.b16 %v1303
        %v1336 = vpack.c.b16 %v1321, %v1320
        %v1337 = vpack.c.b16 %v1323, %v1322
        %v1338 = vpack.c.b16 %v1325, %v1324
        %v1339 = vpack.c.b16 %v1327, %v1326
        %v1340 = vpack.c.b16 %v1329, %v1328
        %v1341 = vpack.c.b16 %v1331, %v1330
        %v1342 = vpack.c.b16 %v1333, %v1332
        %v1343 = vpack.c.b16 %v1335, %v1334
        %1352 = vmatprep.subr.bf16.mxu0 0
        %1353 = vmatpush1.bf16.msra.mxu0 %v1343
        %1354 = vmatprep.subr.bf16.mxu0 0
        %1355 = vmatpush1.bf16.msra.mxu0 %v1342
        %1356 = vmatprep.subr.bf16.mxu0 0
        %1357 = vmatpush1.bf16.msra.mxu0 %v1341
        %1358 = vmatprep.subr.bf16.mxu0 0
        %1359 = vmatpush1.bf16.msra.mxu0 %v1340
        %1360 = vmatprep.subr.bf16.mxu0 0
        %1361 = vmatpush1.bf16.msra.mxu0 %v1339
        %1362 = vmatprep.subr.bf16.mxu0 0
        %1363 = vmatpush1.bf16.msra.mxu0 %v1338
        %1364 = vmatprep.subr.bf16.mxu0 0
        %1365 = vmatpush1.bf16.msra.mxu0 %v1337
        %1366 = vmatprep.subr.bf16.mxu0 0
        %1367 = vmatpush1.bf16.msra.mxu0 %v1336
        %1368 = vmatprep.subr.bf16.mxu0 0
        %1369 = vmatpush2.bf16.msra.mxu0 0
        %1370 = vmatprep.subr.bf16.mxu0 0
        %1371 = vmatpush2.bf16.msra.mxu0 0
        %1372 = vmatprep.subr.bf16.mxu0 0
        %1373 = vmatpush2.bf16.msra.mxu0 0
        %1374 = vmatprep.subr.bf16.mxu0 0
        %1375 = vmatpush2.bf16.msra.mxu0 0
        %1376 = vmatprep.subr.bf16.mxu0 0
        %1377 = vmatpush2.bf16.msra.mxu0 0
        %1378 = vmatprep.subr.bf16.mxu0 0
        %1379 = vmatpush2.bf16.msra.mxu0 0
        %1380 = vmatprep.subr.bf16.mxu0 0
        %1381 = vmatpush2.bf16.msra.mxu0 0
        %1382 = vmatprep.subr.bf16.mxu0 0
        %1383 = vmatpush2.bf16.msra.mxu0 0
        %1384 = vmatprep.mubr.bf16.mxu0 0
        %1385 = vmatmul.mubr.bf16.gmra.mxu0 %v1271
        %v1386 = vpop.f32.mrf.mxu0
        %v1387 = vadd.f32 0.0, %v1386
        %v1388 = vpop.f32.mrf.mxu0
        %v1389 = vpop.f32.mrf.mxu0
        %v1390 = vpop.f32.mrf.mxu0
        %1391 = vdwg.mxu0
        %v1408 = vunpack.c.l.b16 %v1272
        %v1409 = vunpack.c.l.b16 %v1273
        %v1410 = vunpack.c.l.b16 %v1274
        %v1411 = vunpack.c.l.b16 %v1275
        %v1412 = vunpack.c.l.b16 %v1276
        %v1413 = vunpack.c.l.b16 %v1277
        %v1414 = vunpack.c.l.b16 %v1278
        %v1415 = vunpack.c.l.b16 %v1279
        %v1416 = vunpack.c.l.b16 %v1280
        %v1417 = vunpack.c.l.b16 %v1281
        %v1418 = vunpack.c.l.b16 %v1282
        %v1419 = vunpack.c.l.b16 %v1283
        %v1420 = vunpack.c.l.b16 %v1284
        %v1421 = vunpack.c.l.b16 %v1285
        %v1422 = vunpack.c.l.b16 %v1286
        %v1423 = vunpack.c.l.b16 %v1287
        %v1424 = vpack.c.b16 %v1409, %v1408
        %v1425 = vpack.c.b16 %v1411, %v1410
        %v1426 = vpack.c.b16 %v1413, %v1412
        %v1427 = vpack.c.b16 %v1415, %v1414
        %v1428 = vpack.c.b16 %v1417, %v1416
        %v1429 = vpack.c.b16 %v1419, %v1418
        %v1430 = vpack.c.b16 %v1421, %v1420
        %v1431 = vpack.c.b16 %v1423, %v1422
        %1440 = vmatprep.subr.bf16.mxu0 0
        %1441 = vmatpush1.bf16.msra.mxu0 %v1431
        %1442 = vmatprep.subr.bf16.mxu0 0
        %1443 = vmatpush1.bf16.msra.mxu0 %v1430
        %1444 = vmatprep.subr.bf16.mxu0 0
        %1445 = vmatpush1.bf16.msra.mxu0 %v1429
        %1446 = vmatprep.subr.bf16.mxu0 0
        %1447 = vmatpush1.bf16.msra.mxu0 %v1428
        %1448 = vmatprep.subr.bf16.mxu0 0
        %1449 = vmatpush1.bf16.msra.mxu0 %v1427
        %1450 = vmatprep.subr.bf16.mxu0 0
        %1451 = vmatpush1.bf16.msra.mxu0 %v1426
        %1452 = vmatprep.subr.bf16.mxu0 0
        %1453 = vmatpush1.bf16.msra.mxu0 %v1425
        %1454 = vmatprep.subr.bf16.mxu0 0
        %1455 = vmatpush1.bf16.msra.mxu0 %v1424
        %1456 = vmatprep.subr.bf16.mxu0 0
        %1457 = vmatpush2.bf16.msra.mxu0 0
        %1458 = vmatprep.subr.bf16.mxu0 0
        %1459 = vmatpush2.bf16.msra.mxu0 0
        %1460 = vmatprep.subr.bf16.mxu0 0
        %1461 = vmatpush2.bf16.msra.mxu0 0
        %1462 = vmatprep.subr.bf16.mxu0 0
        %1463 = vmatpush2.bf16.msra.mxu0 0
        %1464 = vmatprep.subr.bf16.mxu0 0
        %1465 = vmatpush2.bf16.msra.mxu0 0
        %1466 = vmatprep.subr.bf16.mxu0 0
        %1467 = vmatpush2.bf16.msra.mxu0 0
        %1468 = vmatprep.subr.bf16.mxu0 0
        %1469 = vmatpush2.bf16.msra.mxu0 0
        %1470 = vmatprep.subr.bf16.mxu0 0
        %1471 = vmatpush2.bf16.msra.mxu0 0
        %1472 = vmatprep.mubr.bf16.mxu0 0
        %1473 = vmatmul.mubr.bf16.gmra.mxu0 %v1270
        %v1474 = vpop.f32.mrf.mxu0
        %v1475 = vadd.f32 %v1387, %v1474
        %v1476 = vpop.f32.mrf.mxu0
        %v1477 = vpop.f32.mrf.mxu0
        %v1478 = vpop.f32.mrf.mxu0
        %1479 = vdwg.mxu0
        %v1480 = vld [vmem:[%s9] sm:$0x1]
        %v1482 = vlaneseq
        %v1483 = vshrl.u32 %v1482, 7
        %v1484 = vsub.s32 0, %v1483
        %v1485 = vrot.slane %v1480, %v1484
        %v1487 = vadd.f32 %v1475, %v1485
        %v1488 = vmax.f32 %v1487, 0.0
        %v1489 = vpack.c.bf16 %v1488, %v1488
        %v1490 = vld [vmem:[#allocation14] sm:$0xf]
        %v1491 = vld [vmem:[#allocation14 + $0x4] sm:$0xf]
        %v1492 = vld [vmem:[#allocation14 + $0x8] sm:$0xf]
        %v1493 = vld [vmem:[#allocation14 + $0xc] sm:$0xf]
        %v1494 = vld [vmem:[#allocation14 + $0x10] sm:$0xf]
        %v1495 = vld [vmem:[#allocation14 + $0x14] sm:$0xf]
        %v1496 = vld [vmem:[#allocation14 + $0x18] sm:$0xf]
        %v1497 = vld [vmem:[#allocation14 + $0x1c] sm:$0xf]
        %v1498 = vld [vmem:[#allocation14 + $0x20] sm:$0xf]
        %v1499 = vld [vmem:[#allocation14 + $0x24] sm:$0xf]
        %v1500 = vld [vmem:[#allocation14 + $0x28] sm:$0xf]
        %v1501 = vld [vmem:[#allocation14 + $0x2c] sm:$0xf]
        %v1502 = vld [vmem:[#allocation14 + $0x30] sm:$0xf]
        %v1503 = vld [vmem:[#allocation14 + $0x34] sm:$0xf]
        %v1504 = vld [vmem:[#allocation14 + $0x38] sm:$0xf]
        %v1505 = vld [vmem:[#allocation14 + $0x3c] sm:$0xf]
        %v1506 = vld [vmem:[%s11] sm:$0x1]
        %v1508 = vlaneseq
        %v1509 = vshrl.u32 %v1508, 7
        %v1510 = vsub.s32 0, %v1509
        %v1511 = vrot.slane %v1506, %v1510
        %v1529 = vunpack.c.l.b16 %v1490
        %v1530 = vunpack.c.l.b16 %v1491
        %v1531 = vunpack.c.l.b16 %v1492
        %v1532 = vunpack.c.l.b16 %v1493
        %v1533 = vunpack.c.l.b16 %v1494
        %v1534 = vunpack.c.l.b16 %v1495
        %v1535 = vunpack.c.l.b16 %v1496
        %v1536 = vunpack.c.l.b16 %v1497
        %v1537 = vunpack.c.l.b16 %v1498
        %v1538 = vunpack.c.l.b16 %v1499
        %v1539 = vunpack.c.l.b16 %v1500
        %v1540 = vunpack.c.l.b16 %v1501
        %v1541 = vunpack.c.l.b16 %v1502
        %v1542 = vunpack.c.l.b16 %v1503
        %v1543 = vunpack.c.l.b16 %v1504
        %v1544 = vunpack.c.l.b16 %v1505
        %v1545 = vpack.c.b16 %v1530, %v1529
        %v1546 = vpack.c.b16 %v1532, %v1531
        %v1547 = vpack.c.b16 %v1534, %v1533
        %v1548 = vpack.c.b16 %v1536, %v1535
        %v1549 = vpack.c.b16 %v1538, %v1537
        %v1550 = vpack.c.b16 %v1540, %v1539
        %v1551 = vpack.c.b16 %v1542, %v1541
        %v1552 = vpack.c.b16 %v1544, %v1543
        %1561 = vmatprep.subr.bf16.mxu0 0
        %1562 = vmatpush1.bf16.msra.mxu0 %v1552
        %1563 = vmatprep.subr.bf16.mxu0 0
        %1564 = vmatpush1.bf16.msra.mxu0 %v1551
        %1565 = vmatprep.subr.bf16.mxu0 0
        %1566 = vmatpush1.bf16.msra.mxu0 %v1550
        %1567 = vmatprep.subr.bf16.mxu0 0
        %1568 = vmatpush1.bf16.msra.mxu0 %v1549
        %1569 = vmatprep.subr.bf16.mxu0 0
        %1570 = vmatpush1.bf16.msra.mxu0 %v1548
        %1571 = vmatprep.subr.bf16.mxu0 0
        %1572 = vmatpush1.bf16.msra.mxu0 %v1547
        %1573 = vmatprep.subr.bf16.mxu0 0
        %1574 = vmatpush1.bf16.msra.mxu0 %v1546
        %1575 = vmatprep.subr.bf16.mxu0 0
        %1576 = vmatpush1.bf16.msra.mxu0 %v1545
        %1577 = vmatprep.subr.bf16.mxu0 0
        %1578 = vmatpush2.bf16.msra.mxu0 0
        %1579 = vmatprep.subr.bf16.mxu0 0
        %1580 = vmatpush2.bf16.msra.mxu0 0
        %1581 = vmatprep.subr.bf16.mxu0 0
        %1582 = vmatpush2.bf16.msra.mxu0 0
        %1583 = vmatprep.subr.bf16.mxu0 0
        %1584 = vmatpush2.bf16.msra.mxu0 0
        %1585 = vmatprep.subr.bf16.mxu0 0
        %1586 = vmatpush2.bf16.msra.mxu0 0
        %1587 = vmatprep.subr.bf16.mxu0 0
        %1588 = vmatpush2.bf16.msra.mxu0 0
        %1589 = vmatprep.subr.bf16.mxu0 0
        %1590 = vmatpush2.bf16.msra.mxu0 0
        %1591 = vmatprep.subr.bf16.mxu0 0
        %1592 = vmatpush2.bf16.msra.mxu0 0
        %1593 = vmatprep.mubr.bf16.mxu0 0
        %1594 = vmatmul.mubr.bf16.gmra.mxu0 %v1489
        %v1595 = vpop.f32.mrf.mxu0
        %v1596 = vadd.f32 %v1511, %v1595
        %v1597 = vpop.f32.mrf.mxu0
        %v1598 = vpop.f32.mrf.mxu0
        %v1599 = vpop.f32.mrf.mxu0
        %1600 = vdwg.mxu0
        %v1601 = vmax.f32 %v1596, 0.0
        %v1602 = vpack.c.bf16 %v1601, %v1601
        %v1603 = vld [vmem:[#allocation16] sm:$0xf]
        %v1604 = vld [vmem:[#allocation16 + $0x4] sm:$0xf]
        %v1605 = vld [vmem:[#allocation16 + $0x8] sm:$0xf]
        %v1606 = vld [vmem:[#allocation16 + $0xc] sm:$0xf]
        %v1607 = vld [vmem:[#allocation16 + $0x10] sm:$0xf]
        %v1608 = vld [vmem:[#allocation16 + $0x14] sm:$0xf]
        %v1609 = vld [vmem:[#allocation16 + $0x18] sm:$0xf]
        %v1610 = vld [vmem:[#allocation16 + $0x1c] sm:$0xf]
        %v1611 = vld [vmem:[#allocation16 + $0x20] sm:$0xf]
        %v1612 = vld [vmem:[#allocation16 + $0x24] sm:$0xf]
        %v1613 = vld [vmem:[#allocation16 + $0x28] sm:$0xf]
        %v1614 = vld [vmem:[#allocation16 + $0x2c] sm:$0xf]
        %v1615 = vld [vmem:[#allocation16 + $0x30] sm:$0xf]
        %v1616 = vld [vmem:[#allocation16 + $0x34] sm:$0xf]
        %v1617 = vld [vmem:[#allocation16 + $0x38] sm:$0xf]
        %v1618 = vld [vmem:[#allocation16 + $0x3c] sm:$0xf]
        %v1619 = vld [vmem:[%s13] sm:$0x1]
        %v1621 = vlaneseq
        %v1622 = vshrl.u32 %v1621, 7
        %v1623 = vsub.s32 0, %v1622
        %v1624 = vrot.slane %v1619, %v1623
        %v1642 = vunpack.c.l.b16 %v1603
        %v1643 = vunpack.c.l.b16 %v1604
        %v1644 = vunpack.c.l.b16 %v1605
        %v1645 = vunpack.c.l.b16 %v1606
        %v1646 = vunpack.c.l.b16 %v1607
        %v1647 = vunpack.c.l.b16 %v1608
        %v1648 = vunpack.c.l.b16 %v1609
        %v1649 = vunpack.c.l.b16 %v1610
        %v1650 = vunpack.c.l.b16 %v1611
        %v1651 = vunpack.c.l.b16 %v1612
        %v1652 = vunpack.c.l.b16 %v1613
        %v1653 = vunpack.c.l.b16 %v1614
        %v1654 = vunpack.c.l.b16 %v1615
        %v1655 = vunpack.c.l.b16 %v1616
        %v1656 = vunpack.c.l.b16 %v1617
        %v1657 = vunpack.c.l.b16 %v1618
        %v1658 = vpack.c.b16 %v1643, %v1642
        %v1659 = vpack.c.b16 %v1645, %v1644
        %v1660 = vpack.c.b16 %v1647, %v1646
        %v1661 = vpack.c.b16 %v1649, %v1648
        %v1662 = vpack.c.b16 %v1651, %v1650
        %v1663 = vpack.c.b16 %v1653, %v1652
        %v1664 = vpack.c.b16 %v1655, %v1654
        %v1665 = vpack.c.b16 %v1657, %v1656
        %1674 = vmatprep.subr.bf16.mxu0 0
        %1675 = vmatpush1.bf16.msra.mxu0 %v1665
        %1676 = vmatprep.subr.bf16.mxu0 0
        %1677 = vmatpush1.bf16.msra.mxu0 %v1664
        %1678 = vmatprep.subr.bf16.mxu0 0
        %1679 = vmatpush1.bf16.msra.mxu0 %v1663
        %1680 = vmatprep.subr.bf16.mxu0 0
        %1681 = vmatpush1.bf16.msra.mxu0 %v1662
        %1682 = vmatprep.subr.bf16.mxu0 0
        %1683 = vmatpush1.bf16.msra.mxu0 %v1661
        %1684 = vmatprep.subr.bf16.mxu0 0
        %1685 = vmatpush1.bf16.msra.mxu0 %v1660
        %1686 = vmatprep.subr.bf16.mxu0 0
        %1687 = vmatpush1.bf16.msra.mxu0 %v1659
        %1688 = vmatprep.subr.bf16.mxu0 0
        %1689 = vmatpush1.bf16.msra.mxu0 %v1658
        %1690 = vmatprep.subr.bf16.mxu0 0
        %1691 = vmatpush2.bf16.msra.mxu0 0
        %1692 = vmatprep.subr.bf16.mxu0 0
        %1693 = vmatpush2.bf16.msra.mxu0 0
        %1694 = vmatprep.subr.bf16.mxu0 0
        %1695 = vmatpush2.bf16.msra.mxu0 0
        %1696 = vmatprep.subr.bf16.mxu0 0
        %1697 = vmatpush2.bf16.msra.mxu0 0
        %1698 = vmatprep.subr.bf16.mxu0 0
        %1699 = vmatpush2.bf16.msra.mxu0 0
        %1700 = vmatprep.subr.bf16.mxu0 0
        %1701 = vmatpush2.bf16.msra.mxu0 0
        %1702 = vmatprep.subr.bf16.mxu0 0
        %1703 = vmatpush2.bf16.msra.mxu0 0
        %1704 = vmatprep.subr.bf16.mxu0 0
        %1705 = vmatpush2.bf16.msra.mxu0 0
        %1706 = vmatprep.mubr.bf16.mxu0 0
        %1707 = vmatmul.mubr.bf16.gmra.mxu0 %v1602
        %v1708 = vpop.f32.mrf.mxu0
        %v1709 = vadd.f32 %v1624, %v1708
        %v1710 = vpop.f32.mrf.mxu0
        %v1711 = vpop.f32.mrf.mxu0
        %v1712 = vpop.f32.mrf.mxu0
        %1713 = vdwg.mxu0
        %v1714 = vsub.f32 0.0, %v1709
        %v1715 = vmul.f32 %v1714, 1.442695
        %v1716 = vpow.pop %v1715
        %v1717 = vadd.f32 %v1716, 1.0
        %v1718 = vrcp.pop %v1717
        %v1719 = vmul.f32 1.0, %v1718
        %1720 = vst [vmem:[%s945] sm:$0xff] %v1719
        %v1721 = vld [vmem:[#allocation17] sm:$0xf]
        %v1722 = vld [vmem:[#allocation17 + $0x4] sm:$0xf]
        %v1723 = vld [vmem:[#allocation17 + $0x8] sm:$0xf]
        %v1724 = vld [vmem:[#allocation17 + $0xc] sm:$0xf]
        %v1725 = vld [vmem:[#allocation17 + $0x10] sm:$0xf]
        %v1726 = vld [vmem:[#allocation17 + $0x14] sm:$0xf]
        %v1727 = vld [vmem:[#allocation17 + $0x18] sm:$0xf]
        %v1728 = vld [vmem:[#allocation17 + $0x1c] sm:$0xf]
        %v1729 = vld [vmem:[#allocation17 + $0x20] sm:$0xf]
        %v1730 = vld [vmem:[#allocation17 + $0x24] sm:$0xf]
        %v1731 = vld [vmem:[#allocation17 + $0x28] sm:$0xf]
        %v1732 = vld [vmem:[#allocation17 + $0x2c] sm:$0xf]
        %v1733 = vld [vmem:[#allocation17 + $0x30] sm:$0xf]
        %v1734 = vld [vmem:[#allocation17 + $0x34] sm:$0xf]
        %v1735 = vld [vmem:[#allocation17 + $0x38] sm:$0xf]
        %v1736 = vld [vmem:[#allocation17 + $0x3c] sm:$0xf]
        %v1737 = vld [vmem:[%s837] sm:$0xf]
        %v1738 = vld [vmem:[#allocation19] sm:$0xf]
        %v1739 = vld [vmem:[#allocation19 + $0x4] sm:$0xf]
        %v1740 = vld [vmem:[#allocation19 + $0x8] sm:$0xf]
        %v1741 = vld [vmem:[#allocation19 + $0xc] sm:$0xf]
        %v1742 = vld [vmem:[#allocation19 + $0x10] sm:$0xf]
        %v1743 = vld [vmem:[#allocation19 + $0x14] sm:$0xf]
        %v1744 = vld [vmem:[#allocation19 + $0x18] sm:$0xf]
        %v1745 = vld [vmem:[#allocation19 + $0x1c] sm:$0xf]
        %v1746 = vld [vmem:[#allocation19 + $0x20] sm:$0xf]
        %v1747 = vld [vmem:[#allocation19 + $0x24] sm:$0xf]
        %v1748 = vld [vmem:[#allocation19 + $0x28] sm:$0xf]
        %v1749 = vld [vmem:[#allocation19 + $0x2c] sm:$0xf]
        %v1750 = vld [vmem:[#allocation19 + $0x30] sm:$0xf]
        %v1751 = vld [vmem:[#allocation19 + $0x34] sm:$0xf]
        %v1752 = vld [vmem:[#allocation19 + $0x38] sm:$0xf]
        %v1753 = vld [vmem:[#allocation19 + $0x3c] sm:$0xf]
        %v1770 = vunpack.c.l.b16 %v1738
        %v1771 = vunpack.c.l.b16 %v1739
        %v1772 = vunpack.c.l.b16 %v1740
        %v1773 = vunpack.c.l.b16 %v1741
        %v1774 = vunpack.c.l.b16 %v1742
        %v1775 = vunpack.c.l.b16 %v1743
        %v1776 = vunpack.c.l.b16 %v1744
        %v1777 = vunpack.c.l.b16 %v1745
        %v1778 = vunpack.c.l.b16 %v1746
        %v1779 = vunpack.c.l.b16 %v1747
        %v1780 = vunpack.c.l.b16 %v1748
        %v1781 = vunpack.c.l.b16 %v1749
        %v1782 = vunpack.c.l.b16 %v1750
        %v1783 = vunpack.c.l.b16 %v1751
        %v1784 = vunpack.c.l.b16 %v1752
        %v1785 = vunpack.c.l.b16 %v1753
        %v1786 = vpack.c.b16 %v1771, %v1770
        %v1787 = vpack.c.b16 %v1773, %v1772
        %v1788 = vpack.c.b16 %v1775, %v1774
        %v1789 = vpack.c.b16 %v1777, %v1776
        %v1790 = vpack.c.b16 %v1779, %v1778
        %v1791 = vpack.c.b16 %v1781, %v1780
        %v1792 = vpack.c.b16 %v1783, %v1782
        %v1793 = vpack.c.b16 %v1785, %v1784
        %1802 = vmatprep.subr.bf16.mxu0 0
        %1803 = vmatpush1.bf16.msra.mxu0 %v1793
        %1804 = vmatprep.subr.bf16.mxu0 0
        %1805 = vmatpush1.bf16.msra.mxu0 %v1792
        %1806 = vmatprep.subr.bf16.mxu0 0
        %1807 = vmatpush1.bf16.msra.mxu0 %v1791
        %1808 = vmatprep.subr.bf16.mxu0 0
        %1809 = vmatpush1.bf16.msra.mxu0 %v1790
        %1810 = vmatprep.subr.bf16.mxu0 0
        %1811 = vmatpush1.bf16.msra.mxu0 %v1789
        %1812 = vmatprep.subr.bf16.mxu0 0
        %1813 = vmatpush1.bf16.msra.mxu0 %v1788
        %1814 = vmatprep.subr.bf16.mxu0 0
        %1815 = vmatpush1.bf16.msra.mxu0 %v1787
        %1816 = vmatprep.subr.bf16.mxu0 0
        %1817 = vmatpush1.bf16.msra.mxu0 %v1786
        %1818 = vmatprep.subr.bf16.mxu0 0
        %1819 = vmatpush2.bf16.msra.mxu0 0
        %1820 = vmatprep.subr.bf16.mxu0 0
        %1821 = vmatpush2.bf16.msra.mxu0 0
        %1822 = vmatprep.subr.bf16.mxu0 0
        %1823 = vmatpush2.bf16.msra.mxu0 0
        %1824 = vmatprep.subr.bf16.mxu0 0
        %1825 = vmatpush2.bf16.msra.mxu0 0
        %1826 = vmatprep.subr.bf16.mxu0 0
        %1827 = vmatpush2.bf16.msra.mxu0 0
        %1828 = vmatprep.subr.bf16.mxu0 0
        %1829 = vmatpush2.bf16.msra.mxu0 0
        %1830 = vmatprep.subr.bf16.mxu0 0
        %1831 = vmatpush2.bf16.msra.mxu0 0
        %1832 = vmatprep.subr.bf16.mxu0 0
        %1833 = vmatpush2.bf16.msra.mxu0 0
        %1834 = vmatprep.mubr.bf16.mxu0 0
        %1835 = vmatmul.mubr.bf16.gmra.mxu0 %v1737
        %v1836 = vpop.f32.mrf.mxu0
        %v1837 = vadd.f32 0.0, %v1836
        %v1838 = vpop.f32.mrf.mxu0
        %v1839 = vpop.f32.mrf.mxu0
        %v1840 = vpop.f32.mrf.mxu0
        %1841 = vdwg.mxu0
        %v1858 = vunpack.c.l.b16 %v1721
        %v1859 = vunpack.c.l.b16 %v1722
        %v1860 = vunpack.c.l.b16 %v1723
        %v1861 = vunpack.c.l.b16 %v1724
        %v1862 = vunpack.c.l.b16 %v1725
        %v1863 = vunpack.c.l.b16 %v1726
        %v1864 = vunpack.c.l.b16 %v1727
        %v1865 = vunpack.c.l.b16 %v1728
        %v1866 = vunpack.c.l.b16 %v1729
        %v1867 = vunpack.c.l.b16 %v1730
        %v1868 = vunpack.c.l.b16 %v1731
        %v1869 = vunpack.c.l.b16 %v1732
        %v1870 = vunpack.c.l.b16 %v1733
        %v1871 = vunpack.c.l.b16 %v1734
        %v1872 = vunpack.c.l.b16 %v1735
        %v1873 = vunpack.c.l.b16 %v1736
        %v1874 = vpack.c.b16 %v1859, %v1858
        %v1875 = vpack.c.b16 %v1861, %v1860
        %v1876 = vpack.c.b16 %v1863, %v1862
        %v1877 = vpack.c.b16 %v1865, %v1864
        %v1878 = vpack.c.b16 %v1867, %v1866
        %v1879 = vpack.c.b16 %v1869, %v1868
        %v1880 = vpack.c.b16 %v1871, %v1870
        %v1881 = vpack.c.b16 %v1873, %v1872
        %1890 = vmatprep.subr.bf16.mxu0 0
        %1891 = vmatpush1.bf16.msra.mxu0 %v1881
        %1892 = vmatprep.subr.bf16.mxu0 0
        %1893 = vmatpush1.bf16.msra.mxu0 %v1880
        %1894 = vmatprep.subr.bf16.mxu0 0
        %1895 = vmatpush1.bf16.msra.mxu0 %v1879
        %1896 = vmatprep.subr.bf16.mxu0 0
        %1897 = vmatpush1.bf16.msra.mxu0 %v1878
        %1898 = vmatprep.subr.bf16.mxu0 0
        %1899 = vmatpush1.bf16.msra.mxu0 %v1877
        %1900 = vmatprep.subr.bf16.mxu0 0
        %1901 = vmatpush1.bf16.msra.mxu0 %v1876
        %1902 = vmatprep.subr.bf16.mxu0 0
        %1903 = vmatpush1.bf16.msra.mxu0 %v1875
        %1904 = vmatprep.subr.bf16.mxu0 0
        %1905 = vmatpush1.bf16.msra.mxu0 %v1874
        %1906 = vmatprep.subr.bf16.mxu0 0
        %1907 = vmatpush2.bf16.msra.mxu0 0
        %1908 = vmatprep.subr.bf16.mxu0 0
        %1909 = vmatpush2.bf16.msra.mxu0 0
        %1910 = vmatprep.subr.bf16.mxu0 0
        %1911 = vmatpush2.bf16.msra.mxu0 0
        %1912 = vmatprep.subr.bf16.mxu0 0
        %1913 = vmatpush2.bf16.msra.mxu0 0
        %1914 = vmatprep.subr.bf16.mxu0 0
        %1915 = vmatpush2.bf16.msra.mxu0 0
        %1916 = vmatprep.subr.bf16.mxu0 0
        %1917 = vmatpush2.bf16.msra.mxu0 0
        %1918 = vmatprep.subr.bf16.mxu0 0
        %1919 = vmatpush2.bf16.msra.mxu0 0
        %1920 = vmatprep.subr.bf16.mxu0 0
        %1921 = vmatpush2.bf16.msra.mxu0 0
        %1922 = vmatprep.mubr.bf16.mxu0 0
        %1923 = vmatmul.mubr.bf16.gmra.mxu0 %v1270
        %v1924 = vpop.f32.mrf.mxu0
        %v1925 = vadd.f32 %v1837, %v1924
        %v1926 = vpop.f32.mrf.mxu0
        %v1927 = vpop.f32.mrf.mxu0
        %v1928 = vpop.f32.mrf.mxu0
        %1929 = vdwg.mxu0
        %v1930 = vld [vmem:[%s16] sm:$0x1]
        %v1932 = vlaneseq
        %v1933 = vshrl.u32 %v1932, 7
        %v1934 = vsub.s32 0, %v1933
        %v1935 = vrot.slane %v1930, %v1934
        %v1937 = vadd.f32 %v1925, %v1935
        %v1938 = vmax.f32 %v1937, 0.0
        %v1939 = vpack.c.bf16 %v1938, %v1938
        %v1940 = vld [vmem:[#allocation20] sm:$0xf]
        %v1941 = vld [vmem:[#allocation20 + $0x4] sm:$0xf]
        %v1942 = vld [vmem:[#allocation20 + $0x8] sm:$0xf]
        %v1943 = vld [vmem:[#allocation20 + $0xc] sm:$0xf]
        %v1944 = vld [vmem:[#allocation20 + $0x10] sm:$0xf]
        %v1945 = vld [vmem:[#allocation20 + $0x14] sm:$0xf]
        %v1946 = vld [vmem:[#allocation20 + $0x18] sm:$0xf]
        %v1947 = vld [vmem:[#allocation20 + $0x1c] sm:$0xf]
        %v1948 = vld [vmem:[#allocation20 + $0x20] sm:$0xf]
        %v1949 = vld [vmem:[#allocation20 + $0x24] sm:$0xf]
        %v1950 = vld [vmem:[#allocation20 + $0x28] sm:$0xf]
        %v1951 = vld [vmem:[#allocation20 + $0x2c] sm:$0xf]
        %v1952 = vld [vmem:[#allocation20 + $0x30] sm:$0xf]
        %v1953 = vld [vmem:[#allocation20 + $0x34] sm:$0xf]
        %v1954 = vld [vmem:[#allocation20 + $0x38] sm:$0xf]
        %v1955 = vld [vmem:[#allocation20 + $0x3c] sm:$0xf]
        %v1956 = vld [vmem:[%s18] sm:$0x1]
        %v1958 = vlaneseq
        %v1959 = vshrl.u32 %v1958, 7
        %v1960 = vsub.s32 0, %v1959
        %v1961 = vrot.slane %v1956, %v1960
        %v1979 = vunpack.c.l.b16 %v1940
        %v1980 = vunpack.c.l.b16 %v1941
        %v1981 = vunpack.c.l.b16 %v1942
        %v1982 = vunpack.c.l.b16 %v1943
        %v1983 = vunpack.c.l.b16 %v1944
        %v1984 = vunpack.c.l.b16 %v1945
        %v1985 = vunpack.c.l.b16 %v1946
        %v1986 = vunpack.c.l.b16 %v1947
        %v1987 = vunpack.c.l.b16 %v1948
        %v1988 = vunpack.c.l.b16 %v1949
        %v1989 = vunpack.c.l.b16 %v1950
        %v1990 = vunpack.c.l.b16 %v1951
        %v1991 = vunpack.c.l.b16 %v1952
        %v1992 = vunpack.c.l.b16 %v1953
        %v1993 = vunpack.c.l.b16 %v1954
        %v1994 = vunpack.c.l.b16 %v1955
        %v1995 = vpack.c.b16 %v1980, %v1979
        %v1996 = vpack.c.b16 %v1982, %v1981
        %v1997 = vpack.c.b16 %v1984, %v1983
        %v1998 = vpack.c.b16 %v1986, %v1985
        %v1999 = vpack.c.b16 %v1988, %v1987
        %v2000 = vpack.c.b16 %v1990, %v1989
        %v2001 = vpack.c.b16 %v1992, %v1991
        %v2002 = vpack.c.b16 %v1994, %v1993
        %2011 = vmatprep.subr.bf16.mxu0 0
        %2012 = vmatpush1.bf16.msra.mxu0 %v2002
        %2013 = vmatprep.subr.bf16.mxu0 0
        %2014 = vmatpush1.bf16.msra.mxu0 %v2001
        %2015 = vmatprep.subr.bf16.mxu0 0
        %2016 = vmatpush1.bf16.msra.mxu0 %v2000
        %2017 = vmatprep.subr.bf16.mxu0 0
        %2018 = vmatpush1.bf16.msra.mxu0 %v1999
        %2019 = vmatprep.subr.bf16.mxu0 0
        %2020 = vmatpush1.bf16.msra.mxu0 %v1998
        %2021 = vmatprep.subr.bf16.mxu0 0
        %2022 = vmatpush1.bf16.msra.mxu0 %v1997
        %2023 = vmatprep.subr.bf16.mxu0 0
        %2024 = vmatpush1.bf16.msra.mxu0 %v1996
        %2025 = vmatprep.subr.bf16.mxu0 0
        %2026 = vmatpush1.bf16.msra.mxu0 %v1995
        %2027 = vmatprep.subr.bf16.mxu0 0
        %2028 = vmatpush2.bf16.msra.mxu0 0
        %2029 = vmatprep.subr.bf16.mxu0 0
        %2030 = vmatpush2.bf16.msra.mxu0 0
        %2031 = vmatprep.subr.bf16.mxu0 0
        %2032 = vmatpush2.bf16.msra.mxu0 0
        %2033 = vmatprep.subr.bf16.mxu0 0
        %2034 = vmatpush2.bf16.msra.mxu0 0
        %2035 = vmatprep.subr.bf16.mxu0 0
        %2036 = vmatpush2.bf16.msra.mxu0 0
        %2037 = vmatprep.subr.bf16.mxu0 0
        %2038 = vmatpush2.bf16.msra.mxu0 0
        %2039 = vmatprep.subr.bf16.mxu0 0
        %2040 = vmatpush2.bf16.msra.mxu0 0
        %2041 = vmatprep.subr.bf16.mxu0 0
        %2042 = vmatpush2.bf16.msra.mxu0 0
        %2043 = vmatprep.mubr.bf16.mxu0 0
        %2044 = vmatmul.mubr.bf16.gmra.mxu0 %v1939
        %v2045 = vpop.f32.mrf.mxu0
        %v2046 = vadd.f32 %v1961, %v2045
        %v2047 = vpop.f32.mrf.mxu0
        %v2048 = vpop.f32.mrf.mxu0
        %v2049 = vpop.f32.mrf.mxu0
        %2050 = vdwg.mxu0
        %v2051 = vmax.f32 %v2046, 0.0
        %v2052 = vpack.c.bf16 %v2051, %v2051
        %v2053 = vld [vmem:[#allocation22] sm:$0xf]
        %v2054 = vld [vmem:[#allocation22 + $0x4] sm:$0xf]
        %v2055 = vld [vmem:[#allocation22 + $0x8] sm:$0xf]
        %v2056 = vld [vmem:[#allocation22 + $0xc] sm:$0xf]
        %v2057 = vld [vmem:[#allocation22 + $0x10] sm:$0xf]
        %v2058 = vld [vmem:[#allocation22 + $0x14] sm:$0xf]
        %v2059 = vld [vmem:[#allocation22 + $0x18] sm:$0xf]
        %v2060 = vld [vmem:[#allocation22 + $0x1c] sm:$0xf]
        %v2061 = vld [vmem:[#allocation22 + $0x20] sm:$0xf]
        %v2062 = vld [vmem:[#allocation22 + $0x24] sm:$0xf]
        %v2063 = vld [vmem:[#allocation22 + $0x28] sm:$0xf]
        %v2064 = vld [vmem:[#allocation22 + $0x2c] sm:$0xf]
        %v2065 = vld [vmem:[#allocation22 + $0x30] sm:$0xf]
        %v2066 = vld [vmem:[#allocation22 + $0x34] sm:$0xf]
        %v2067 = vld [vmem:[#allocation22 + $0x38] sm:$0xf]
        %v2068 = vld [vmem:[#allocation22 + $0x3c] sm:$0xf]
        %v2069 = vld [vmem:[%s20] sm:$0x1]
        %v2071 = vlaneseq
        %v2072 = vshrl.u32 %v2071, 7
        %v2073 = vsub.s32 0, %v2072
        %v2074 = vrot.slane %v2069, %v2073
        %v2092 = vunpack.c.l.b16 %v2053
        %v2093 = vunpack.c.l.b16 %v2054
        %v2094 = vunpack.c.l.b16 %v2055
        %v2095 = vunpack.c.l.b16 %v2056
        %v2096 = vunpack.c.l.b16 %v2057
        %v2097 = vunpack.c.l.b16 %v2058
        %v2098 = vunpack.c.l.b16 %v2059
        %v2099 = vunpack.c.l.b16 %v2060
        %v2100 = vunpack.c.l.b16 %v2061
        %v2101 = vunpack.c.l.b16 %v2062
        %v2102 = vunpack.c.l.b16 %v2063
        %v2103 = vunpack.c.l.b16 %v2064
        %v2104 = vunpack.c.l.b16 %v2065
        %v2105 = vunpack.c.l.b16 %v2066
        %v2106 = vunpack.c.l.b16 %v2067
        %v2107 = vunpack.c.l.b16 %v2068
        %v2108 = vpack.c.b16 %v2093, %v2092
        %v2109 = vpack.c.b16 %v2095, %v2094
        %v2110 = vpack.c.b16 %v2097, %v2096
        %v2111 = vpack.c.b16 %v2099, %v2098
        %v2112 = vpack.c.b16 %v2101, %v2100
        %v2113 = vpack.c.b16 %v2103, %v2102
        %v2114 = vpack.c.b16 %v2105, %v2104
        %v2115 = vpack.c.b16 %v2107, %v2106
        %2124 = vmatprep.subr.bf16.mxu0 0
        %2125 = vmatpush1.bf16.msra.mxu0 %v2115
        %2126 = vmatprep.subr.bf16.mxu0 0
        %2127 = vmatpush1.bf16.msra.mxu0 %v2114
        %2128 = vmatprep.subr.bf16.mxu0 0
        %2129 = vmatpush1.bf16.msra.mxu0 %v2113
        %2130 = vmatprep.subr.bf16.mxu0 0
        %2131 = vmatpush1.bf16.msra.mxu0 %v2112
        %2132 = vmatprep.subr.bf16.mxu0 0
        %2133 = vmatpush1.bf16.msra.mxu0 %v2111
        %2134 = vmatprep.subr.bf16.mxu0 0
        %2135 = vmatpush1.bf16.msra.mxu0 %v2110
        %2136 = vmatprep.subr.bf16.mxu0 0
        %2137 = vmatpush1.bf16.msra.mxu0 %v2109
        %2138 = vmatprep.subr.bf16.mxu0 0
        %2139 = vmatpush1.bf16.msra.mxu0 %v2108
        %2140 = vmatprep.subr.bf16.mxu0 0
        %2141 = vmatpush2.bf16.msra.mxu0 0
        %2142 = vmatprep.subr.bf16.mxu0 0
        %2143 = vmatpush2.bf16.msra.mxu0 0
        %2144 = vmatprep.subr.bf16.mxu0 0
        %2145 = vmatpush2.bf16.msra.mxu0 0
        %2146 = vmatprep.subr.bf16.mxu0 0
        %2147 = vmatpush2.bf16.msra.mxu0 0
        %2148 = vmatprep.subr.bf16.mxu0 0
        %2149 = vmatpush2.bf16.msra.mxu0 0
        %2150 = vmatprep.subr.bf16.mxu0 0
        %2151 = vmatpush2.bf16.msra.mxu0 0
        %2152 = vmatprep.subr.bf16.mxu0 0
        %2153 = vmatpush2.bf16.msra.mxu0 0
        %2154 = vmatprep.subr.bf16.mxu0 0
        %2155 = vmatpush2.bf16.msra.mxu0 0
        %2156 = vmatprep.mubr.bf16.mxu0 0
        %2157 = vmatmul.mubr.bf16.gmra.mxu0 %v2052
        %v2158 = vpop.f32.mrf.mxu0
        %v2159 = vadd.f32 %v2074, %v2158
        %v2160 = vpop.f32.mrf.mxu0
        %v2161 = vpop.f32.mrf.mxu0
        %v2162 = vpop.f32.mrf.mxu0
        %2163 = vdwg.mxu0
        %2164 = vst [vmem:[%s959] sm:$0xff] %v2159
        %s2165 = sand.u32 %s516, 1
        %s2166 = scalar_lea.sflag [#allocation4], %s2165
        %s2167 = sand.u32 %s516, 1
        %s2168 = smul.addr %s2167, 8
        %s2169 = scalar_lea.vmem [#allocation23], %s2168
        %s2170 = sand.u32 %s52, 1
        %s2171 = scalar_lea.sflag [#allocation25], %s2170
        %s2172 = sand.u32 %s542, 1
        %s2173 = smul.addr %s2172, 8
        %s2174 = scalar_lea.vmem [#allocation24], %s2173
        %s2175 = sand.u32 %s52, 1
        %s2176 = scalar_lea.sflag [#allocation25], %s2175
        %s2177 = sand.u32 %s568, 1
        %s2178 = smul.addr %s2177, 8
        %s2179 = scalar_lea.vmem [#allocation26], %s2178
        // Predicated region
        $region157: #{tpu_custom_call.1} parent=103 // pred_check
          %p2180 = pneg %p526
        $region158: #{tpu_custom_call.1} parent=103 // pred_check_branch
          %2182 = sbr.rel (%p2180) target = $region160
        $region159: #{tpu_custom_call.1} parent=103 // pred_region
          %s2184 = ssub.s32 128, 128
          %2185 = vsyncadd %s2166, %s2184
          %s2186 = smul.addr %s52, 128
          %s2187 = scalar_lea.hbm %s21, %s2186
          %s2189 = sshll.u32 %s2169, 4
          %s2190 = int_to_ptr.vmem [resolvable:$true] %s2189
          %2192 = dma.vmem_to_hbm [thread:$0]  %s2190, 128, %s2187, %s2166
        $region160: #{tpu_custom_call.1} parent=103 // pred_fallthru
          _
        // Predicated region
        $region161: #{tpu_custom_call.1} parent=103 // pred_check
          %p2193 = pneg %p552
        $region162: #{tpu_custom_call.1} parent=103 // pred_check_branch
          %2195 = sbr.rel (%p2193) target = $region164
        $region163: #{tpu_custom_call.1} parent=103 // pred_region
          %s2197 = ssub.s32 128, 128
          %2198 = vsyncadd %s2171, %s2197
          %s2199 = smul.addr %s52, 128
          %s2200 = scalar_lea.hbm %s22, %s2199
          %s2202 = sshll.u32 %s2174, 4
          %s2203 = int_to_ptr.vmem [resolvable:$true] %s2202
          %2205 = dma.vmem_to_hbm [thread:$0]  %s2203, 128, %s2200, %s2171
        $region164: #{tpu_custom_call.1} parent=103 // pred_fallthru
          _
        // Predicated region
        $region165: #{tpu_custom_call.1} parent=103 // pred_check
          %p2206 = pneg %p578
        $region166: #{tpu_custom_call.1} parent=103 // pred_check_branch
          %2208 = sbr.rel (%p2206) target = $region168
        $region167: #{tpu_custom_call.1} parent=103 // pred_region
          %s2210 = ssub.s32 128, 128
          %2211 = vsyncadd %s2176, %s2210
          %s2212 = smul.addr %s52, 128
          %s2213 = scalar_lea.hbm %s23, %s2212
          %s2215 = sshll.u32 %s2179, 4
          %s2216 = int_to_ptr.vmem [resolvable:$true] %s2215
          %2218 = dma.vmem_to_hbm [thread:$0]  %s2216, 128, %s2213, %s2176
        $region168: #{tpu_custom_call.1} parent=103 // pred_fallthru
          _
      $region104: #{tpu_custom_call.1} parent=5 // pred_fallthru
        _
      %p2219 = scmp.le.s32.totalorder 2, %s47
      // Predicated region
      $region169: #{tpu_custom_call.1} parent=5 // pred_check
        %p2220 = pneg %p2219
      $region170: #{tpu_custom_call.1} parent=5 // pred_check_branch
        %2222 = sbr.rel (%p2220) target = $region172
      $region171: #{tpu_custom_call.1} parent=5 // pred_region
        %s2223 = ssub.s32 %s47, 2
        // Predicated region
        $region173: #{tpu_custom_call.1} parent=171 // pred_check
          %p2224 = pneg %p532
        $region174: #{tpu_custom_call.1} parent=171 // pred_check_branch
          %2226 = sbr.rel (%p2224) target = $region176
        $region175: #{tpu_custom_call.1} parent=171 // pred_region
          %s2227 = sand.u32 %s517, 1
          %s2228 = scalar_lea.sflag [#allocation4], %s2227
          %s2229 = sand.u32 %s517, 1
          %s2230 = smul.addr %s2229, 8
          %s2231 = scalar_lea.vmem [#allocation23], %s2230
          %2232 = dma.done %s2228, 128
        $region176: #{tpu_custom_call.1} parent=171 // pred_fallthru
          _
        // Predicated region
        $region177: #{tpu_custom_call.1} parent=171 // pred_check
          %p2233 = pneg %p558
        $region178: #{tpu_custom_call.1} parent=171 // pred_check_branch
          %2235 = sbr.rel (%p2233) target = $region180
        $region179: #{tpu_custom_call.1} parent=171 // pred_region
          %s2236 = sand.u32 %s53, 1
          %s2237 = scalar_lea.sflag [#allocation25], %s2236
          %s2238 = sand.u32 %s543, 1
          %s2239 = smul.addr %s2238, 8
          %s2240 = scalar_lea.vmem [#allocation24], %s2239
          %2241 = dma.done %s2237, 128
        $region180: #{tpu_custom_call.1} parent=171 // pred_fallthru
          _
        // Predicated region
        $region181: #{tpu_custom_call.1} parent=171 // pred_check
          %p2242 = pneg %p584
        $region182: #{tpu_custom_call.1} parent=171 // pred_check_branch
          %2244 = sbr.rel (%p2242) target = $region184
        $region183: #{tpu_custom_call.1} parent=171 // pred_region
          %s2245 = sand.u32 %s53, 1
          %s2246 = scalar_lea.sflag [#allocation25], %s2245
          %s2247 = sand.u32 %s569, 1
          %s2248 = smul.addr %s2247, 8
          %s2249 = scalar_lea.vmem [#allocation26], %s2248
          %2250 = dma.done %s2246, 128
        $region184: #{tpu_custom_call.1} parent=171 // pred_fallthru
          _
      $region172: #{tpu_custom_call.1} parent=5 // pred_fallthru
        _
    $region6: #{tpu_custom_call.1} parent=1 // loop_footer
      %s51 = sadd.s32 1, %s47
    $region7: #{tpu_custom_call.1} parent=1 // loop_footer_branch
      %46 = sbr.rel target = $region3
    $region8: #{tpu_custom_call.1} parent=1 // loop_exit
      _
    %2251 = vsyncpa [#allocation3], 1
    %s2252 = scalar_lea.sflag [#allocation3], 1
    %2253 = vsyncpa %s2252, 1
    %2254 = vsyncpa [#allocation6], 1
    %s2255 = scalar_lea.sflag [#allocation6], 1
    %2256 = vsyncpa %s2255, 1
    %2257 = vsyncpa [#allocation9], 1
    %2258 = vsyncpa [#allocation12], 1
    %2259 = vsyncpa [#allocation15], 1
    %2260 = vsyncpa [#allocation18], 1
    %2261 = vsyncpa [#allocation21], 1
    %2262 = vsyncpa [#allocation4], 1
    %s2263 = scalar_lea.sflag [#allocation4], 1
    %2264 = vsyncpa %s2263, 1
    %2265 = vsyncpa [#allocation25], 1
    %s2266 = scalar_lea.sflag [#allocation25], 1
    %2267 = vsyncpa %s2266, 1

</llo_original>
